<compile_context>
chip_gen: v7x
topology: tpu7x:2x2x1
jax: 0.10.0
libtpu: 0.0.40
codegen_flags: <defaults>
</compile_context>

<pallas_src>
import jax
import jax.numpy as jnp
from jax.experimental import pallas as pl
from jax.experimental.pallas import tpu as pltpu


def tvae_kernel(
    x_ref,      # [TB, D]      bf16   dense input tile
    featm_ref,  # [D, F]       bf16   feature matrix (right operand of x @ feat)
    w0x_ref,    # [D, H1]      bf16   inet[0] weight, rows for the x part
    w0f_ref,    # [F, H1]      bf16   inet[0] weight, rows for the feat part
    b0_ref,     # [1, H1]      f32
    wms_ref,    # [H1, OUT_W]  bf16   fused [wmu | wsg] in cols 0:2*NZ, zero pad
    bms_ref,    # [1, OUT_W]   f32    fused [bmu | bsg] in cols 0:2*NZ, zero pad
    g0_ref,     # [NZ, H1]     bf16   gnet[0]
    gb0_ref,    # [1, H1]      f32
    g1_ref,     # [H1, OUT_W]  bf16   gnet[1] in cols 2*NZ : 2*NZ+D, zero pad
    gb1_ref,    # [1, OUT_W]   f32
    eps_ref,    # [TB, NZ]     bf16   gaussian noise for reparameterization
    out_ref,    # [TB, OUT_W]  f32    slab: [mu | logvar | recon | pad]
):
    nz = eps_ref.shape[1]

    x = x_ref[...]                                                   # bf16

    # feat = normalize(x @ feat, p=1, dim=1)
    feat = jnp.dot(x, featm_ref[...], preferred_element_type=jnp.float32)
    denom = jnp.maximum(jnp.sum(jnp.abs(feat), axis=1, keepdims=True), 1e-12)
    feat = feat * pl.reciprocal(denom, approx=False)                 # EUP, not VALU
    feat = feat.astype(jnp.bfloat16)

    # encode: h = relu(cat(x, feat) @ W0 + b0)   (concat folded into split matmul)
    h = (
        jnp.dot(x, w0x_ref[...], preferred_element_type=jnp.float32)
        + jnp.dot(feat, w0f_ref[...], preferred_element_type=jnp.float32)
        + b0_ref[...]
    )
    h = jnp.maximum(h, 0.0).astype(jnp.bfloat16)

    # fused mu|sigma head, padded into the output slab columns.
    ms = jnp.dot(h, wms_ref[...], preferred_element_type=jnp.float32) + bms_ref[...]
    mu = ms[:, :nz]
    logvar = ms[:, nz:2 * nz]

    # reparameterize (training mode), fp32: z = eps * exp(0.5 * logvar) + mu
    z = eps_ref[...].astype(jnp.float32) * jnp.exp(0.5 * logvar) + mu
    z = z.astype(jnp.bfloat16)

    # decode: hd = relu(z @ G0 + gb0); recon_slab = hd @ G1_pad + gb1_pad
    hd = jnp.dot(z, g0_ref[...], preferred_element_type=jnp.float32) + gb0_ref[...]
    hd = jnp.maximum(hd, 0.0).astype(jnp.bfloat16)
    recon_slab = (
        jnp.dot(hd, g1_ref[...], preferred_element_type=jnp.float32) + gb1_ref[...]
    )

    # ms holds [mu|logvar] in cols 0:2*NZ (zeros elsewhere); recon_slab holds
    # recon in cols 2*NZ:2*NZ+D (zeros elsewhere) -> one lane-dense 128-wide store.
    out_ref[...] = ms + recon_slab


def tvae_forward(x, featm, params, eps, *, tb=256):
    """Full TVAE forward, batch-tiled over a 1-D grid; returns (recon, mu, logvar)."""
    B, D = x.shape
    F = featm.shape[1]
    H1 = params["w0x"].shape[1]
    NZ = params["wmu"].shape[1]
    out_w = 128 * pl.cdiv(2 * NZ + D, 128)   # lane-dense output slab width

    bf = jnp.bfloat16

    # ---- pack / pad / cast parameters (bf16 MXU operands, fp32 biases) ----
    wms = jnp.concatenate([params["wmu"], params["wsg"]], axis=1)        # [H1, 2NZ]
    wms = jnp.pad(wms, ((0, 0), (0, out_w - 2 * NZ))).astype(bf)
    bms = jnp.concatenate([params["bmu"], params["bsg"]], axis=1)
    bms = jnp.pad(bms, ((0, 0), (0, out_w - 2 * NZ)))
    g1p = jnp.pad(params["g1"], ((0, 0), (2 * NZ, out_w - 2 * NZ - D))).astype(bf)
    gb1p = jnp.pad(params["gb1"], ((0, 0), (2 * NZ, out_w - 2 * NZ - D)))

    w0x = params["w0x"].astype(bf)
    w0f = params["w0f"].astype(bf)
    g0 = params["g0"].astype(bf)
    featm_b = featm.astype(bf)

    # ---- batch tiling (pad batch to a multiple of the tile) ----
    n_tiles = pl.cdiv(B, tb)
    b_pad = n_tiles * tb
    if b_pad != B:
        x = jnp.pad(x, ((0, b_pad - B), (0, 0)))
        eps = jnp.pad(eps, ((0, b_pad - B), (0, 0)))
    x_b = x.astype(bf)
    eps_b = eps.astype(bf)

    def resident(arr):  # weights / biases: same block every grid step (VMEM-resident)
        return pl.BlockSpec(arr.shape, lambda i: (0, 0))

    inputs = (
        x_b, featm_b, w0x, w0f, params["b0"],
        wms, bms, g0, params["gb0"], g1p, gb1p, eps_b,
    )
    in_specs = [
        pl.BlockSpec((tb, D), lambda i: (i, 0)),       # x tile
        resident(featm_b), resident(w0x), resident(w0f), resident(params["b0"]),
        resident(wms), resident(bms), resident(g0), resident(params["gb0"]),
        resident(g1p), resident(gb1p),
        pl.BlockSpec((tb, NZ), lambda i: (i, 0)),      # eps tile
    ]

    slab = pl.pallas_call(
        tvae_kernel,
        out_shape=jax.ShapeDtypeStruct((b_pad, out_w), jnp.float32),
        grid=(n_tiles,),
        in_specs=in_specs,
        out_specs=pl.BlockSpec((tb, out_w), lambda i: (i, 0)),
        compiler_params=pltpu.CompilerParams(
            dimension_semantics=("parallel",),          # v7x: split over both TCs
            vmem_limit_bytes=16 << 20,                  # real footprint << 1 MiB
        ),
    )(*inputs)

    mu = slab[:B, :NZ]
    logvar = slab[:B, NZ:2 * NZ]
    recon = slab[:B, 2 * NZ:2 * NZ + D]
    return recon, mu, logvar


def make_params(key, d, feat_len, layers):
    """Deterministic synthetic parameters matching the nn.Linear shapes.

    Weights are stored already transposed to [in, out] (fp32 master copies)."""
    assert len(layers) == 2, "this script instantiates the l=2 configuration"
    h1, nz = layers
    ks = jax.random.split(key, 7)

    def lin(k, fan_in, fan_out):
        scale = 1.0 / jnp.sqrt(fan_in)
        kw, kb = jax.random.split(k)
        w = jax.random.uniform(kw, (fan_in, fan_out), jnp.float32, -scale, scale)
        b = jax.random.uniform(kb, (1, fan_out), jnp.float32, -scale, scale)
        return w, b

    w0, b0 = lin(ks[0], d + feat_len, h1)      # inet[0]: Linear(d+feat_len -> h1)
    wmu, bmu = lin(ks[1], h1, nz)              # mu:      Linear(h1 -> nz)
    wsg, bsg = lin(ks[2], h1, nz)              # sigma:   Linear(h1 -> nz)
    g0, gb0 = lin(ks[3], nz, h1)               # gnet[0]: Linear(nz -> h1)
    g1, gb1 = lin(ks[4], h1, d)                # gnet[1]: Linear(h1 -> d)

    return {
        "w0x": w0[:d, :], "w0f": w0[d:, :], "b0": b0,
        "wmu": wmu, "bmu": bmu,
        "wsg": wsg, "bsg": bsg,
        "g0": g0, "gb0": gb0,
        "g1": g1, "gb1": gb1,
    }


def tvae_reference(x, featm, params, eps):
    """Pure-JAX fp32 reference mirroring the PyTorch forward, for validation."""
    feat = x @ featm
    feat = feat / jnp.maximum(jnp.sum(jnp.abs(feat), axis=1, keepdims=True), 1e-12)
    h = jnp.concatenate([x, feat], axis=1)
    w0 = jnp.concatenate([params["w0x"], params["w0f"]], axis=0)
    h = jax.nn.relu(h @ w0 + params["b0"])
    mu = h @ params["wmu"] + params["bmu"]
    logvar = h @ params["wsg"] + params["bsg"]
    z = eps * jnp.exp(0.5 * logvar) + mu
    hd = jax.nn.relu(z @ params["g0"] + params["gb0"])
    recon = hd @ params["g1"] + params["gb1"]
    return recon, mu, logvar


if __name__ == "__main__":
    # d=64, feat_len=8, layer=[32, 16]; batch chosen to exercise the grid
    # (4 tiles of 256 rows, with a padded remainder tile).
    B, D, F = 1000, 64, 8
    LAYERS = [32, 16]
    TB = 256

    key = jax.random.PRNGKey(0)
    kx, kf, kp, ke = jax.random.split(key, 4)

    # TODO(synk): torch sparse x + .to_dense() has no Pallas equivalent; x is dense.
    x = jax.random.normal(kx, (B, D), jnp.float32)
    featm = jax.random.normal(kf, (D, F), jnp.float32)
    params = make_params(kp, D, F, LAYERS)
    # TODO(synk): torch.randn_like inside reparameterize is replaced by host-provided
    # eps so the kernel stays bit-comparable to the reference (in-kernel
    # pltpu.prng_random_bits would remove this HBM stream but break that check).
    eps = jax.random.normal(ke, (B, LAYERS[-1]), jnp.float32)

    recon, mu, logvar = tvae_forward(x, featm, params, eps, tb=TB)
    jax.block_until_ready((recon, mu, logvar))

    r_ref, mu_ref, lv_ref = tvae_reference(x, featm, params, eps)
    # bf16 MXU operands (fp32 accumulation) vs fp32 reference -> relaxed tolerance.
    assert jnp.allclose(mu, mu_ref, atol=5e-2, rtol=5e-2), \
        float(jnp.max(jnp.abs(mu - mu_ref)))
    assert jnp.allclose(logvar, lv_ref, atol=5e-2, rtol=5e-2), \
        float(jnp.max(jnp.abs(logvar - lv_ref)))
    assert jnp.allclose(recon, r_ref, atol=5e-2, rtol=5e-2), \
        float(jnp.max(jnp.abs(recon - r_ref)))

    print("KERNEL_OK")
</pallas_src>

<mosaic_0001>
module attributes {stable_mosaic.version = 11 : i64} {
  func.func @tvae_kernel(%arg0: i32, %arg1: memref<256x64xbf16, #tpu.memory_space<vmem>>, %arg2: memref<64x8xbf16, #tpu.memory_space<vmem>>, %arg3: memref<64x32xbf16, #tpu.memory_space<vmem>>, %arg4: memref<8x32xbf16, #tpu.memory_space<vmem>>, %arg5: memref<1x32xf32, #tpu.memory_space<vmem>>, %arg6: memref<32x128xbf16, #tpu.memory_space<vmem>>, %arg7: memref<1x128xf32, #tpu.memory_space<vmem>>, %arg8: memref<16x32xbf16, #tpu.memory_space<vmem>>, %arg9: memref<1x32xf32, #tpu.memory_space<vmem>>, %arg10: memref<32x128xbf16, #tpu.memory_space<vmem>>, %arg11: memref<1x128xf32, #tpu.memory_space<vmem>>, %arg12: memref<256x16xbf16, #tpu.memory_space<vmem>>, %arg13: memref<256x128xf32, #tpu.memory_space<vmem>>) attributes {dimension_semantics = [#tpu.dimension_semantics<parallel>], iteration_bounds = array<i64: 4>, scalar_prefetch = 0 : i64, scratch_operands = 0 : i64, tpu.core_type = #tpu.core_type<tc>, window_params = [{transform_indices = @transform_0, window_bounds = array<i64: 256, 64>}, {pipeline_mode = #tpu.pipeline_mode<synchronous>, transform_indices = @transform_1, window_bounds = array<i64: 64, 8>}, {pipeline_mode = #tpu.pipeline_mode<synchronous>, transform_indices = @transform_2, window_bounds = array<i64: 64, 32>}, {pipeline_mode = #tpu.pipeline_mode<synchronous>, transform_indices = @transform_3, window_bounds = array<i64: 8, 32>}, {pipeline_mode = #tpu.pipeline_mode<synchronous>, transform_indices = @transform_4, window_bounds = array<i64: 1, 32>}, {pipeline_mode = #tpu.pipeline_mode<synchronous>, transform_indices = @transform_5, window_bounds = array<i64: 32, 128>}, {pipeline_mode = #tpu.pipeline_mode<synchronous>, transform_indices = @transform_6, window_bounds = array<i64: 1, 128>}, {pipeline_mode = #tpu.pipeline_mode<synchronous>, transform_indices = @transform_7, window_bounds = array<i64: 16, 32>}, {pipeline_mode = #tpu.pipeline_mode<synchronous>, transform_indices = @transform_8, window_bounds = array<i64: 1, 32>}, {pipeline_mode = #tpu.pipeline_mode<synchronous>, transform_indices = @transform_9, window_bounds = array<i64: 32, 128>}, {pipeline_mode = #tpu.pipeline_mode<synchronous>, transform_indices = @transform_10, window_bounds = array<i64: 1, 128>}, {transform_indices = @transform_11, window_bounds = array<i64: 256, 16>}, {transform_indices = @transform_12, window_bounds = array<i64: 256, 128>}]} {
    %c0 = arith.constant 0 : index
    %c0_0 = arith.constant 0 : index
    %0 = vector.load %arg1[%c0, %c0_0] : memref<256x64xbf16, #tpu.memory_space<vmem>>, vector<256x64xbf16>
    %c0_1 = arith.constant 0 : index
    %c0_2 = arith.constant 0 : index
    %1 = vector.load %arg2[%c0_1, %c0_2] : memref<64x8xbf16, #tpu.memory_space<vmem>>, vector<64x8xbf16>
    %cst = arith.constant dense<0.000000e+00> : vector<256x8xf32>
    %2 = tpu.matmul %0, %1, %cst {dimension_numbers = #tpu.dot_dimension_numbers<[1], [0], [0], [1], [0, 0, 1, 1], [], []>} : vector<256x64xbf16>, vector<64x8xbf16>, vector<256x8xf32> -> vector<256x8xf32>
    %3 = math.absf %2 : vector<256x8xf32>
    %cst_3 = arith.constant dense<0.000000e+00> : vector<256xf32>
    %4 = vector.multi_reduction <add>, %3, %cst_3 [1] : vector<256x8xf32> to vector<256xf32>
    %5 = vector.shape_cast %4 : vector<256xf32> to vector<256x1xf32>
    %cst_4 = arith.constant 9.99999996E-13 : f32
    %6 = vector.broadcast %cst_4 : f32 to vector<256x1xf32>
    %7 = arith.maximumf %5, %6 : vector<256x1xf32>
    %8 = tpu.reciprocal %7 : vector<256x1xf32> -> vector<256x1xf32>
    %9 = vector.broadcast %8 : vector<256x1xf32> to vector<256x8xf32>
    %10 = arith.mulf %2, %9 : vector<256x8xf32>
    %11 = arith.truncf %10 : vector<256x8xf32> to vector<256x8xbf16>
    %c0_5 = arith.constant 0 : index
    %c0_6 = arith.constant 0 : index
    %12 = vector.load %arg3[%c0_5, %c0_6] : memref<64x32xbf16, #tpu.memory_space<vmem>>, vector<64x32xbf16>
    %cst_7 = arith.constant dense<0.000000e+00> : vector<256x32xf32>
    %13 = tpu.matmul %0, %12, %cst_7 {dimension_numbers = #tpu.dot_dimension_numbers<[1], [0], [0], [1], [0, 0, 1, 1], [], []>} : vector<256x64xbf16>, vector<64x32xbf16>, vector<256x32xf32> -> vector<256x32xf32>
    %c0_8 = arith.constant 0 : index
    %c0_9 = arith.constant 0 : index
    %14 = vector.load %arg4[%c0_8, %c0_9] : memref<8x32xbf16, #tpu.memory_space<vmem>>, vector<8x32xbf16>
    %cst_10 = arith.constant dense<0.000000e+00> : vector<256x32xf32>
    %15 = tpu.matmul %11, %14, %cst_10 {dimension_numbers = #tpu.dot_dimension_numbers<[1], [0], [0], [1], [0, 0, 1, 1], [], []>} : vector<256x8xbf16>, vector<8x32xbf16>, vector<256x32xf32> -> vector<256x32xf32>
    %16 = arith.addf %13, %15 : vector<256x32xf32>
    %c0_11 = arith.constant 0 : index
    %c0_12 = arith.constant 0 : index
    %17 = vector.load %arg5[%c0_11, %c0_12] : memref<1x32xf32, #tpu.memory_space<vmem>>, vector<1x32xf32>
    %18 = vector.broadcast %17 : vector<1x32xf32> to vector<256x32xf32>
    %19 = arith.addf %16, %18 : vector<256x32xf32>
    %cst_13 = arith.constant 0.000000e+00 : f32
    %20 = vector.broadcast %cst_13 : f32 to vector<256x32xf32>
    %21 = arith.maximumf %19, %20 : vector<256x32xf32>
    %22 = arith.truncf %21 : vector<256x32xf32> to vector<256x32xbf16>
    %c0_14 = arith.constant 0 : index
    %c0_15 = arith.constant 0 : index
    %23 = vector.load %arg6[%c0_14, %c0_15] : memref<32x128xbf16, #tpu.memory_space<vmem>>, vector<32x128xbf16>
    %cst_16 = arith.constant dense<0.000000e+00> : vector<256x128xf32>
    %24 = tpu.matmul %22, %23, %cst_16 {dimension_numbers = #tpu.dot_dimension_numbers<[1], [0], [0], [1], [0, 0, 1, 1], [], []>} : vector<256x32xbf16>, vector<32x128xbf16>, vector<256x128xf32> -> vector<256x128xf32>
    %c0_17 = arith.constant 0 : index
    %c0_18 = arith.constant 0 : index
    %25 = vector.load %arg7[%c0_17, %c0_18] : memref<1x128xf32, #tpu.memory_space<vmem>>, vector<1x128xf32>
    %26 = vector.broadcast %25 : vector<1x128xf32> to vector<256x128xf32>
    %27 = arith.addf %24, %26 : vector<256x128xf32>
    %28 = vector.extract_strided_slice %27 {offsets = [0, 0], sizes = [256, 16], strides = [1, 1]} : vector<256x128xf32> to vector<256x16xf32>
    %29 = vector.extract_strided_slice %27 {offsets = [0, 16], sizes = [256, 16], strides = [1, 1]} : vector<256x128xf32> to vector<256x16xf32>
    %c0_19 = arith.constant 0 : index
    %c0_20 = arith.constant 0 : index
    %30 = vector.load %arg12[%c0_19, %c0_20] : memref<256x16xbf16, #tpu.memory_space<vmem>>, vector<256x16xbf16>
    %31 = arith.extf %30 : vector<256x16xbf16> to vector<256x16xf32>
    %cst_21 = arith.constant 5.000000e-01 : f32
    %32 = vector.broadcast %cst_21 : f32 to vector<256x16xf32>
    %33 = arith.mulf %32, %29 : vector<256x16xf32>
    %34 = math.exp %33 : vector<256x16xf32>
    %35 = arith.mulf %31, %34 : vector<256x16xf32>
    %36 = arith.addf %35, %28 : vector<256x16xf32>
    %37 = arith.truncf %36 : vector<256x16xf32> to vector<256x16xbf16>
    %c0_22 = arith.constant 0 : index
    %c0_23 = arith.constant 0 : index
    %38 = vector.load %arg8[%c0_22, %c0_23] : memref<16x32xbf16, #tpu.memory_space<vmem>>, vector<16x32xbf16>
    %cst_24 = arith.constant dense<0.000000e+00> : vector<256x32xf32>
    %39 = tpu.matmul %37, %38, %cst_24 {dimension_numbers = #tpu.dot_dimension_numbers<[1], [0], [0], [1], [0, 0, 1, 1], [], []>} : vector<256x16xbf16>, vector<16x32xbf16>, vector<256x32xf32> -> vector<256x32xf32>
    %c0_25 = arith.constant 0 : index
    %c0_26 = arith.constant 0 : index
    %40 = vector.load %arg9[%c0_25, %c0_26] : memref<1x32xf32, #tpu.memory_space<vmem>>, vector<1x32xf32>
    %41 = vector.broadcast %40 : vector<1x32xf32> to vector<256x32xf32>
    %42 = arith.addf %39, %41 : vector<256x32xf32>
    %cst_27 = arith.constant 0.000000e+00 : f32
    %43 = vector.broadcast %cst_27 : f32 to vector<256x32xf32>
    %44 = arith.maximumf %42, %43 : vector<256x32xf32>
    %45 = arith.truncf %44 : vector<256x32xf32> to vector<256x32xbf16>
    %c0_28 = arith.constant 0 : index
    %c0_29 = arith.constant 0 : index
    %46 = vector.load %arg10[%c0_28, %c0_29] : memref<32x128xbf16, #tpu.memory_space<vmem>>, vector<32x128xbf16>
    %cst_30 = arith.constant dense<0.000000e+00> : vector<256x128xf32>
    %47 = tpu.matmul %45, %46, %cst_30 {dimension_numbers = #tpu.dot_dimension_numbers<[1], [0], [0], [1], [0, 0, 1, 1], [], []>} : vector<256x32xbf16>, vector<32x128xbf16>, vector<256x128xf32> -> vector<256x128xf32>
    %c0_31 = arith.constant 0 : index
    %c0_32 = arith.constant 0 : index
    %48 = vector.load %arg11[%c0_31, %c0_32] : memref<1x128xf32, #tpu.memory_space<vmem>>, vector<1x128xf32>
    %49 = vector.broadcast %48 : vector<1x128xf32> to vector<256x128xf32>
    %50 = arith.addf %47, %49 : vector<256x128xf32>
    %51 = arith.addf %27, %50 : vector<256x128xf32>
    %c0_33 = arith.constant 0 : index
    %c0_34 = arith.constant 0 : index
    %52 = vector.load %arg13[%c0_33, %c0_34] : memref<256x128xf32, #tpu.memory_space<vmem>>, vector<256x128xf32>
    tpu.vector_store %arg13[%c0_33, %c0_34], %51 {strides = array<i32>} : memref<256x128xf32, #tpu.memory_space<vmem>>, vector<256x128xf32>,
    return
  }
  func.func @transform_0(%arg0: i32) -> (i32, i32) {
    %c0_i32 = arith.constant 0 : i32
    %c0_i32_0 = arith.constant 0 : i32
    return %arg0, %c0_i32 : i32, i32
  }
  func.func @transform_1(%arg0: i32) -> (i32, i32) {
    %c0_i32 = arith.constant 0 : i32
    %c0_i32_0 = arith.constant 0 : i32
    %c0_i32_1 = arith.constant 0 : i32
    return %c0_i32, %c0_i32_0 : i32, i32
  }
  func.func @transform_2(%arg0: i32) -> (i32, i32) {
    %c0_i32 = arith.constant 0 : i32
    %c0_i32_0 = arith.constant 0 : i32
    %c0_i32_1 = arith.constant 0 : i32
    return %c0_i32, %c0_i32_0 : i32, i32
  }
  func.func @transform_3(%arg0: i32) -> (i32, i32) {
    %c0_i32 = arith.constant 0 : i32
    %c0_i32_0 = arith.constant 0 : i32
    %c0_i32_1 = arith.constant 0 : i32
    return %c0_i32, %c0_i32_0 : i32, i32
  }
  func.func @transform_4(%arg0: i32) -> (i32, i32) {
    %c0_i32 = arith.constant 0 : i32
    %c0_i32_0 = arith.constant 0 : i32
    %c0_i32_1 = arith.constant 0 : i32
    return %c0_i32, %c0_i32_0 : i32, i32
  }
  func.func @transform_5(%arg0: i32) -> (i32, i32) {
    %c0_i32 = arith.constant 0 : i32
    %c0_i32_0 = arith.constant 0 : i32
    %c0_i32_1 = arith.constant 0 : i32
    return %c0_i32, %c0_i32_0 : i32, i32
  }
  func.func @transform_6(%arg0: i32) -> (i32, i32) {
    %c0_i32 = arith.constant 0 : i32
    %c0_i32_0 = arith.constant 0 : i32
    %c0_i32_1 = arith.constant 0 : i32
    return %c0_i32, %c0_i32_0 : i32, i32
  }
  func.func @transform_7(%arg0: i32) -> (i32, i32) {
    %c0_i32 = arith.constant 0 : i32
    %c0_i32_0 = arith.constant 0 : i32
    %c0_i32_1 = arith.constant 0 : i32
    return %c0_i32, %c0_i32_0 : i32, i32
  }
  func.func @transform_8(%arg0: i32) -> (i32, i32) {
    %c0_i32 = arith.constant 0 : i32
    %c0_i32_0 = arith.constant 0 : i32
    %c0_i32_1 = arith.constant 0 : i32
    return %c0_i32, %c0_i32_0 : i32, i32
  }
  func.func @transform_9(%arg0: i32) -> (i32, i32) {
    %c0_i32 = arith.constant 0 : i32
    %c0_i32_0 = arith.constant 0 : i32
    %c0_i32_1 = arith.constant 0 : i32
    return %c0_i32, %c0_i32_0 : i32, i32
  }
  func.func @transform_10(%arg0: i32) -> (i32, i32) {
    %c0_i32 = arith.constant 0 : i32
    %c0_i32_0 = arith.constant 0 : i32
    %c0_i32_1 = arith.constant 0 : i32
    return %c0_i32, %c0_i32_0 : i32, i32
  }
  func.func @transform_11(%arg0: i32) -> (i32, i32) {
    %c0_i32 = arith.constant 0 : i32
    %c0_i32_0 = arith.constant 0 : i32
    return %arg0, %c0_i32 : i32, i32
  }
  func.func @transform_12(%arg0: i32) -> (i32, i32) {
    %c0_i32 = arith.constant 0 : i32
    %c0_i32_0 = arith.constant 0 : i32
    return %arg0, %c0_i32 : i32, i32
  }
}

</mosaic_0001>

<llo_original>
// kernel: tpu_custom_call.1
$region0: #{tpu_custom_call.1}
  #allocation0 [shape = 'u32[]', space=smem, size = 0x4, offset = 0x4, fixed_abs, tag = 'smem constant byte address 0x4 - core index']
  #allocation1 [shape = 'u32[144,128]{1,0:T(1,128)}', space=vmem, size = 0x12000, scoped, tag = 'internal scratch']
  %s0 = inlined_call_operand.vmem [shape: bf16[1024,64], index: 0, kind: input, shape index: {}]
  %s1 = inlined_call_operand.vmem [shape: bf16[64,8], index: 1, kind: input, shape index: {}]
  %s2 = inlined_call_operand.vmem [shape: bf16[64,32], index: 2, kind: input, shape index: {}]
  %s3 = inlined_call_operand.vmem [shape: bf16[8,32], index: 3, kind: input, shape index: {}]
  %s4 = inlined_call_operand.vmem [shape: f32[1,32], index: 4, kind: input, shape index: {}]
  %s5 = inlined_call_operand.vmem [shape: bf16[32,128], index: 5, kind: input, shape index: {}]
  %s6 = inlined_call_operand.vmem [shape: f32[1,128], index: 6, kind: input, shape index: {}]
  %s7 = inlined_call_operand.vmem [shape: bf16[16,32], index: 7, kind: input, shape index: {}]
  %s8 = inlined_call_operand.vmem [shape: f32[1,32], index: 8, kind: input, shape index: {}]
  %s9 = inlined_call_operand.vmem [shape: bf16[32,128], index: 9, kind: input, shape index: {}]
  %s10 = inlined_call_operand.vmem [shape: f32[1,128], index: 10, kind: input, shape index: {}]
  %s11 = inlined_call_operand.vmem [shape: bf16[1024,16], index: 11, kind: input, shape index: {}]
  %s12 = inlined_call_operand.hbm [shape: f32[1024,128], index: 12, kind: output, shape index: {}]
  %s13 = sld [smem:[#allocation0]]
  $region81: #{tpu_custom_call.1} parent=0
    _
  %s15 = ssub.s32 1, %s13
  %s16 = scalar_select 0, %s15, %s13
  $region1: #{tpu_custom_call.1} parent=0
    #allocation2 [shape = 'u8[262144]{0}', space=vmem, size = 0x40000, scoped, tag = 'output window, operand 0']
    #allocation3 [shape = 's32[2]{0}', space=sflag, size = 0x8, scoped, tag = 'scoped memory for tpu_custom_call.1']
    %17 = vsyncpa [#allocation3], 0
    %s18 = scalar_lea.sflag [#allocation3], 1
    %19 = vsyncpa %s18, 0
    loop: start=0, step=1, limit=6
    $region2: #{tpu_custom_call.1} parent=1 // loop_pre_header
      _
    $region3: #{tpu_custom_call.1} parent=1 // loop_header
      %s21 = sphi 0, %s25
      %p22 = scmp.ge.s32.totalorder %s21, 6
      %s31 = sphi 0, %s33
      %s34 = sphi 0, %s31
      %s35 = sphi 0, %s34
      %s51 = sphi 0, %s35
      %s55 = sphi 0, %s55
      %s57 = sphi 0, %s55
      %s58 = sphi 0, %s57
      %s72 = sphi 0, %s58
      %s76 = sphi 0, %s76
      %s78 = sphi 0, %s76
      %s79 = sphi 0, %s78
      %s93 = sphi 0, %s79
      %s97 = sphi 0, %s97
      %s99 = sphi 0, %s97
      %s100 = sphi 0, %s99
      %s114 = sphi 0, %s100
      %s118 = sphi 0, %s118
      %s120 = sphi 0, %s118
      %s121 = sphi 0, %s120
      %s135 = sphi 0, %s121
      %s139 = sphi 0, %s139
      %s141 = sphi 0, %s139
      %s142 = sphi 0, %s141
      %s156 = sphi 0, %s142
      %s160 = sphi 0, %s160
      %s162 = sphi 0, %s160
      %s163 = sphi 0, %s162
      %s177 = sphi 0, %s163
      %s181 = sphi 0, %s181
      %s183 = sphi 0, %s181
      %s184 = sphi 0, %s183
      %s198 = sphi 0, %s184
      %s202 = sphi 0, %s202
      %s204 = sphi 0, %s202
      %s205 = sphi 0, %s204
      %s219 = sphi 0, %s205
      %s223 = sphi 0, %s223
      %s225 = sphi 0, %s223
      %s226 = sphi 0, %s225
      %s240 = sphi 0, %s226
      %s244 = sphi 0, %s244
      %s246 = sphi 0, %s244
      %s247 = sphi 0, %s246
      %s261 = sphi 0, %s247
      %s267 = sphi 0, %s269
      %s270 = sphi 0, %s267
      %s271 = sphi 0, %s270
      %s287 = sphi 0, %s271
      %s293 = sphi 0, %s295
      %s296 = sphi 0, %s293
      %s297 = sphi 0, %s296
      %s313 = sphi 0, %s297
    $region4: #{tpu_custom_call.1} parent=1 // loop_header_branch
      %24 = sbr.rel (%p22) target = $region8
    $region5: #{tpu_custom_call.1} parent=1 // loop_body
      %s26 = ssub.s32 %s21, 1
      %s27 = ssub.s32 %s21, 2
      %s28 = sadd.s32 %s21, 1
      %s29 = ssub.s32 %s21, %s28
      %p30 = scmp.eq.s32.totalorder %s29, 0
      %s32 = sadd.s32 %s31, 1
      %s33 = scalar_select %p30, %s31, %s32
      %p36 = pneg %p30
      %p37 = scmp.eq.s32.totalorder %s21, 3
      %p38 = por %p36, %p37
      %p39 = scmp.ne.s32.totalorder %s31, %s34
      %p40 = scmp.eq.s32.totalorder %s21, 0
      %p41 = por %p39, %p40
      %p42 = scmp.ne.s32.totalorder %s31, %s34
      %p43 = scmp.eq.s32.totalorder %s26, 3
      %p44 = por %p42, %p43
      %p45 = scmp.ne.s32.totalorder %s34, %s35
      %p46 = scmp.eq.s32.totalorder %s26, 0
      %p47 = por %p45, %p46
      %p48 = scmp.ne.s32.totalorder %s34, %s35
      %p49 = scmp.eq.s32.totalorder %s27, 3
      %p50 = por %p48, %p49
      %p52 = scmp.ne.s32.totalorder %s35, %s51
      %p53 = scmp.eq.s32.totalorder %s27, 0
      %p54 = por %p52, %p53
      %s56 = sadd.s32 %s55, 1
      %p59 = scmp.eq.s32.totalorder %s21, 3
      %p60 = scmp.ne.s32.totalorder %s55, %s57
      %p61 = scmp.eq.s32.totalorder %s21, 0
      %p62 = por %p60, %p61
      %p63 = scmp.ne.s32.totalorder %s55, %s57
      %p64 = scmp.eq.s32.totalorder %s26, 3
      %p65 = por %p63, %p64
      %p66 = scmp.ne.s32.totalorder %s57, %s58
      %p67 = scmp.eq.s32.totalorder %s26, 0
      %p68 = por %p66, %p67
      %p69 = scmp.ne.s32.totalorder %s57, %s58
      %p70 = scmp.eq.s32.totalorder %s27, 3
      %p71 = por %p69, %p70
      %p73 = scmp.ne.s32.totalorder %s58, %s72
      %p74 = scmp.eq.s32.totalorder %s27, 0
      %p75 = por %p73, %p74
      %s77 = sadd.s32 %s76, 1
      %p80 = scmp.eq.s32.totalorder %s21, 3
      %p81 = scmp.ne.s32.totalorder %s76, %s78
      %p82 = scmp.eq.s32.totalorder %s21, 0
      %p83 = por %p81, %p82
      %p84 = scmp.ne.s32.totalorder %s76, %s78
      %p85 = scmp.eq.s32.totalorder %s26, 3
      %p86 = por %p84, %p85
      %p87 = scmp.ne.s32.totalorder %s78, %s79
      %p88 = scmp.eq.s32.totalorder %s26, 0
      %p89 = por %p87, %p88
      %p90 = scmp.ne.s32.totalorder %s78, %s79
      %p91 = scmp.eq.s32.totalorder %s27, 3
      %p92 = por %p90, %p91
      %p94 = scmp.ne.s32.totalorder %s79, %s93
      %p95 = scmp.eq.s32.totalorder %s27, 0
      %p96 = por %p94, %p95
      %s98 = sadd.s32 %s97, 1
      %p101 = scmp.eq.s32.totalorder %s21, 3
      %p102 = scmp.ne.s32.totalorder %s97, %s99
      %p103 = scmp.eq.s32.totalorder %s21, 0
      %p104 = por %p102, %p103
      %p105 = scmp.ne.s32.totalorder %s97, %s99
      %p106 = scmp.eq.s32.totalorder %s26, 3
      %p107 = por %p105, %p106
      %p108 = scmp.ne.s32.totalorder %s99, %s100
      %p109 = scmp.eq.s32.totalorder %s26, 0
      %p110 = por %p108, %p109
      %p111 = scmp.ne.s32.totalorder %s99, %s100
      %p112 = scmp.eq.s32.totalorder %s27, 3
      %p113 = por %p111, %p112
      %p115 = scmp.ne.s32.totalorder %s100, %s114
      %p116 = scmp.eq.s32.totalorder %s27, 0
      %p117 = por %p115, %p116
      %s119 = sadd.s32 %s118, 1
      %p122 = scmp.eq.s32.totalorder %s21, 3
      %p123 = scmp.ne.s32.totalorder %s118, %s120
      %p124 = scmp.eq.s32.totalorder %s21, 0
      %p125 = por %p123, %p124
      %p126 = scmp.ne.s32.totalorder %s118, %s120
      %p127 = scmp.eq.s32.totalorder %s26, 3
      %p128 = por %p126, %p127
      %p129 = scmp.ne.s32.totalorder %s120, %s121
      %p130 = scmp.eq.s32.totalorder %s26, 0
      %p131 = por %p129, %p130
      %p132 = scmp.ne.s32.totalorder %s120, %s121
      %p133 = scmp.eq.s32.totalorder %s27, 3
      %p134 = por %p132, %p133
      %p136 = scmp.ne.s32.totalorder %s121, %s135
      %p137 = scmp.eq.s32.totalorder %s27, 0
      %p138 = por %p136, %p137
      %s140 = sadd.s32 %s139, 1
      %p143 = scmp.eq.s32.totalorder %s21, 3
      %p144 = scmp.ne.s32.totalorder %s139, %s141
      %p145 = scmp.eq.s32.totalorder %s21, 0
      %p146 = por %p144, %p145
      %p147 = scmp.ne.s32.totalorder %s139, %s141
      %p148 = scmp.eq.s32.totalorder %s26, 3
      %p149 = por %p147, %p148
      %p150 = scmp.ne.s32.totalorder %s141, %s142
      %p151 = scmp.eq.s32.totalorder %s26, 0
      %p152 = por %p150, %p151
      %p153 = scmp.ne.s32.totalorder %s141, %s142
      %p154 = scmp.eq.s32.totalorder %s27, 3
      %p155 = por %p153, %p154
      %p157 = scmp.ne.s32.totalorder %s142, %s156
      %p158 = scmp.eq.s32.totalorder %s27, 0
      %p159 = por %p157, %p158
      %s161 = sadd.s32 %s160, 1
      %p164 = scmp.eq.s32.totalorder %s21, 3
      %p165 = scmp.ne.s32.totalorder %s160, %s162
      %p166 = scmp.eq.s32.totalorder %s21, 0
      %p167 = por %p165, %p166
      %p168 = scmp.ne.s32.totalorder %s160, %s162
      %p169 = scmp.eq.s32.totalorder %s26, 3
      %p170 = por %p168, %p169
      %p171 = scmp.ne.s32.totalorder %s162, %s163
      %p172 = scmp.eq.s32.totalorder %s26, 0
      %p173 = por %p171, %p172
      %p174 = scmp.ne.s32.totalorder %s162, %s163
      %p175 = scmp.eq.s32.totalorder %s27, 3
      %p176 = por %p174, %p175
      %p178 = scmp.ne.s32.totalorder %s163, %s177
      %p179 = scmp.eq.s32.totalorder %s27, 0
      %p180 = por %p178, %p179
      %s182 = sadd.s32 %s181, 1
      %p185 = scmp.eq.s32.totalorder %s21, 3
      %p186 = scmp.ne.s32.totalorder %s181, %s183
      %p187 = scmp.eq.s32.totalorder %s21, 0
      %p188 = por %p186, %p187
      %p189 = scmp.ne.s32.totalorder %s181, %s183
      %p190 = scmp.eq.s32.totalorder %s26, 3
      %p191 = por %p189, %p190
      %p192 = scmp.ne.s32.totalorder %s183, %s184
      %p193 = scmp.eq.s32.totalorder %s26, 0
      %p194 = por %p192, %p193
      %p195 = scmp.ne.s32.totalorder %s183, %s184
      %p196 = scmp.eq.s32.totalorder %s27, 3
      %p197 = por %p195, %p196
      %p199 = scmp.ne.s32.totalorder %s184, %s198
      %p200 = scmp.eq.s32.totalorder %s27, 0
      %p201 = por %p199, %p200
      %s203 = sadd.s32 %s202, 1
      %p206 = scmp.eq.s32.totalorder %s21, 3
      %p207 = scmp.ne.s32.totalorder %s202, %s204
      %p208 = scmp.eq.s32.totalorder %s21, 0
      %p209 = por %p207, %p208
      %p210 = scmp.ne.s32.totalorder %s202, %s204
      %p211 = scmp.eq.s32.totalorder %s26, 3
      %p212 = por %p210, %p211
      %p213 = scmp.ne.s32.totalorder %s204, %s205
      %p214 = scmp.eq.s32.totalorder %s26, 0
      %p215 = por %p213, %p214
      %p216 = scmp.ne.s32.totalorder %s204, %s205
      %p217 = scmp.eq.s32.totalorder %s27, 3
      %p218 = por %p216, %p217
      %p220 = scmp.ne.s32.totalorder %s205, %s219
      %p221 = scmp.eq.s32.totalorder %s27, 0
      %p222 = por %p220, %p221
      %s224 = sadd.s32 %s223, 1
      %p227 = scmp.eq.s32.totalorder %s21, 3
      %p228 = scmp.ne.s32.totalorder %s223, %s225
      %p229 = scmp.eq.s32.totalorder %s21, 0
      %p230 = por %p228, %p229
      %p231 = scmp.ne.s32.totalorder %s223, %s225
      %p232 = scmp.eq.s32.totalorder %s26, 3
      %p233 = por %p231, %p232
      %p234 = scmp.ne.s32.totalorder %s225, %s226
      %p235 = scmp.eq.s32.totalorder %s26, 0
      %p236 = por %p234, %p235
      %p237 = scmp.ne.s32.totalorder %s225, %s226
      %p238 = scmp.eq.s32.totalorder %s27, 3
      %p239 = por %p237, %p238
      %p241 = scmp.ne.s32.totalorder %s226, %s240
      %p242 = scmp.eq.s32.totalorder %s27, 0
      %p243 = por %p241, %p242
      %s245 = sadd.s32 %s244, 1
      %p248 = scmp.eq.s32.totalorder %s21, 3
      %p249 = scmp.ne.s32.totalorder %s244, %s246
      %p250 = scmp.eq.s32.totalorder %s21, 0
      %p251 = por %p249, %p250
      %p252 = scmp.ne.s32.totalorder %s244, %s246
      %p253 = scmp.eq.s32.totalorder %s26, 3
      %p254 = por %p252, %p253
      %p255 = scmp.ne.s32.totalorder %s246, %s247
      %p256 = scmp.eq.s32.totalorder %s26, 0
      %p257 = por %p255, %p256
      %p258 = scmp.ne.s32.totalorder %s246, %s247
      %p259 = scmp.eq.s32.totalorder %s27, 3
      %p260 = por %p258, %p259
      %p262 = scmp.ne.s32.totalorder %s247, %s261
      %p263 = scmp.eq.s32.totalorder %s27, 0
      %p264 = por %p262, %p263
      %s265 = ssub.s32 %s21, %s28
      %p266 = scmp.eq.s32.totalorder %s265, 0
      %s268 = sadd.s32 %s267, 1
      %s269 = scalar_select %p266, %s267, %s268
      %p272 = pneg %p266
      %p273 = scmp.eq.s32.totalorder %s21, 3
      %p274 = por %p272, %p273
      %p275 = scmp.ne.s32.totalorder %s267, %s270
      %p276 = scmp.eq.s32.totalorder %s21, 0
      %p277 = por %p275, %p276
      %p278 = scmp.ne.s32.totalorder %s267, %s270
      %p279 = scmp.eq.s32.totalorder %s26, 3
      %p280 = por %p278, %p279
      %p281 = scmp.ne.s32.totalorder %s270, %s271
      %p282 = scmp.eq.s32.totalorder %s26, 0
      %p283 = por %p281, %p282
      %p284 = scmp.ne.s32.totalorder %s270, %s271
      %p285 = scmp.eq.s32.totalorder %s27, 3
      %p286 = por %p284, %p285
      %p288 = scmp.ne.s32.totalorder %s271, %s287
      %p289 = scmp.eq.s32.totalorder %s27, 0
      %p290 = por %p288, %p289
      %s291 = ssub.s32 %s21, %s28
      %p292 = scmp.eq.s32.totalorder %s291, 0
      %s294 = sadd.s32 %s293, 1
      %s295 = scalar_select %p292, %s293, %s294
      %p298 = pneg %p292
      %p299 = scmp.eq.s32.totalorder %s21, 3
      %p300 = por %p298, %p299
      %p301 = scmp.ne.s32.totalorder %s293, %s296
      %p302 = scmp.eq.s32.totalorder %s21, 0
      %p303 = por %p301, %p302
      %p304 = scmp.ne.s32.totalorder %s293, %s296
      %p305 = scmp.eq.s32.totalorder %s26, 3
      %p306 = por %p304, %p305
      %p307 = scmp.ne.s32.totalorder %s296, %s297
      %p308 = scmp.eq.s32.totalorder %s26, 0
      %p309 = por %p307, %p308
      %p310 = scmp.ne.s32.totalorder %s296, %s297
      %p311 = scmp.eq.s32.totalorder %s27, 3
      %p312 = por %p310, %p311
      %p314 = scmp.ne.s32.totalorder %s297, %s313
      %p315 = scmp.eq.s32.totalorder %s27, 0
      %p316 = por %p314, %p315
      %p317 = scmp.le.s32.totalorder 1, %s21
      %p318 = scmp.lt.s32.totalorder %s21, 5
      %p319 = pnand %p317, %p318
      %p320 = pneg %p319
      // Predicated region
      $region9: #{tpu_custom_call.1} parent=5 // pred_check
        _
      $region10: #{tpu_custom_call.1} parent=5 // pred_check_branch
        %322 = sbr.rel (%p319) target = $region12
      $region11: #{tpu_custom_call.1} parent=5 // pred_region
        %s323 = ssub.s32 %s21, 1
        // Predicated region
        $region13: #{tpu_custom_call.1} parent=11 // pred_check
          %p324 = pneg %p68
        $region14: #{tpu_custom_call.1} parent=11 // pred_check_branch
          %326 = sbr.rel (%p324) target = $region16
        $region15: #{tpu_custom_call.1} parent=11 // pred_region
          _
        $region16: #{tpu_custom_call.1} parent=11 // pred_fallthru
          _
        // Predicated region
        $region17: #{tpu_custom_call.1} parent=11 // pred_check
          %p327 = pneg %p89
        $region18: #{tpu_custom_call.1} parent=11 // pred_check_branch
          %329 = sbr.rel (%p327) target = $region20
        $region19: #{tpu_custom_call.1} parent=11 // pred_region
          _
        $region20: #{tpu_custom_call.1} parent=11 // pred_fallthru
          _
        // Predicated region
        $region21: #{tpu_custom_call.1} parent=11 // pred_check
          %p330 = pneg %p110
        $region22: #{tpu_custom_call.1} parent=11 // pred_check_branch
          %332 = sbr.rel (%p330) target = $region24
        $region23: #{tpu_custom_call.1} parent=11 // pred_region
          _
        $region24: #{tpu_custom_call.1} parent=11 // pred_fallthru
          _
        // Predicated region
        $region25: #{tpu_custom_call.1} parent=11 // pred_check
          %p333 = pneg %p131
        $region26: #{tpu_custom_call.1} parent=11 // pred_check_branch
          %335 = sbr.rel (%p333) target = $region28
        $region27: #{tpu_custom_call.1} parent=11 // pred_region
          _
        $region28: #{tpu_custom_call.1} parent=11 // pred_fallthru
          _
        // Predicated region
        $region29: #{tpu_custom_call.1} parent=11 // pred_check
          %p336 = pneg %p152
        $region30: #{tpu_custom_call.1} parent=11 // pred_check_branch
          %338 = sbr.rel (%p336) target = $region32
        $region31: #{tpu_custom_call.1} parent=11 // pred_region
          _
        $region32: #{tpu_custom_call.1} parent=11 // pred_fallthru
          _
        // Predicated region
        $region33: #{tpu_custom_call.1} parent=11 // pred_check
          %p339 = pneg %p173
        $region34: #{tpu_custom_call.1} parent=11 // pred_check_branch
          %341 = sbr.rel (%p339) target = $region36
        $region35: #{tpu_custom_call.1} parent=11 // pred_region
          _
        $region36: #{tpu_custom_call.1} parent=11 // pred_fallthru
          _
        // Predicated region
        $region37: #{tpu_custom_call.1} parent=11 // pred_check
          %p342 = pneg %p194
        $region38: #{tpu_custom_call.1} parent=11 // pred_check_branch
          %344 = sbr.rel (%p342) target = $region40
        $region39: #{tpu_custom_call.1} parent=11 // pred_region
          _
        $region40: #{tpu_custom_call.1} parent=11 // pred_fallthru
          _
        // Predicated region
        $region41: #{tpu_custom_call.1} parent=11 // pred_check
          %p345 = pneg %p215
        $region42: #{tpu_custom_call.1} parent=11 // pred_check_branch
          %347 = sbr.rel (%p345) target = $region44
        $region43: #{tpu_custom_call.1} parent=11 // pred_region
          _
        $region44: #{tpu_custom_call.1} parent=11 // pred_fallthru
          _
        // Predicated region
        $region45: #{tpu_custom_call.1} parent=11 // pred_check
          %p348 = pneg %p236
        $region46: #{tpu_custom_call.1} parent=11 // pred_check_branch
          %350 = sbr.rel (%p348) target = $region48
        $region47: #{tpu_custom_call.1} parent=11 // pred_region
          _
        $region48: #{tpu_custom_call.1} parent=11 // pred_fallthru
          _
        // Predicated region
        $region49: #{tpu_custom_call.1} parent=11 // pred_check
          %p351 = pneg %p257
        $region50: #{tpu_custom_call.1} parent=11 // pred_check_branch
          %353 = sbr.rel (%p351) target = $region52
        $region51: #{tpu_custom_call.1} parent=11 // pred_region
          _
        $region52: #{tpu_custom_call.1} parent=11 // pred_fallthru
          _
      $region12: #{tpu_custom_call.1} parent=5 // pred_fallthru
        _
      %p354 = scmp.lt.s32.totalorder %s21, 4
      // Predicated region
      $region53: #{tpu_custom_call.1} parent=5 // pred_check
        %p355 = pneg %p354
      $region54: #{tpu_custom_call.1} parent=5 // pred_check_branch
        %357 = sbr.rel (%p355) target = $region56
      $region55: #{tpu_custom_call.1} parent=5 // pred_region
        // Predicated region
        $region57: #{tpu_custom_call.1} parent=55 // pred_check
          %p358 = pneg %p41
        $region58: #{tpu_custom_call.1} parent=55 // pred_check_branch
          %360 = sbr.rel (%p358) target = $region60
        $region59: #{tpu_custom_call.1} parent=55 // pred_region
          %s361 = smul.u32 32, %s21
          %p362 = scmp.lt.s32.totalorder %s361, 127
          %s363 = scalar_select %p362, %s361, 127
          %s364 = smul.addr %s363, 4
          %s365 = scalar_lea.vmem %s0, %s364
          %s366 = smul.u32 32, %s21
        $region60: #{tpu_custom_call.1} parent=55 // pred_fallthru
          _
        // Predicated region
        $region61: #{tpu_custom_call.1} parent=55 // pred_check
          %p367 = pneg %p277
        $region62: #{tpu_custom_call.1} parent=55 // pred_check_branch
          %369 = sbr.rel (%p367) target = $region64
        $region63: #{tpu_custom_call.1} parent=55 // pred_region
          %s370 = smul.u32 32, %s21
          %p371 = scmp.lt.s32.totalorder %s370, 127
          %s372 = scalar_select %p371, %s370, 127
          %s373 = smul.addr %s372, 4
          %s374 = scalar_lea.vmem %s11, %s373
          %s375 = smul.u32 32, %s21
        $region64: #{tpu_custom_call.1} parent=55 // pred_fallthru
          _
      $region56: #{tpu_custom_call.1} parent=5 // pred_fallthru
        _
      %p376 = scmp.le.s32.totalorder 1, %s21
      %p377 = scmp.lt.s32.totalorder %s21, 5
      %p378 = pnand %p376, %p377
      %p379 = pneg %p378
      // Predicated region
      $region65: #{tpu_custom_call.1} parent=5 // pred_check
        _
      $region66: #{tpu_custom_call.1} parent=5 // pred_check_branch
        %381 = sbr.rel (%p378) target = $region68
      $region67: #{tpu_custom_call.1} parent=5 // pred_region
        %s382 = ssub.s32 %s21, 1
        %s383 = smul.u32 32, %s26
        %p384 = scmp.lt.s32.totalorder %s383, 127
        %s385 = scalar_select %p384, %s383, 127
        %s386 = smul.addr %s385, 4
        %s387 = scalar_lea.vmem %s0, %s386
        %p388 = pneg %p47
        %p389 = pneg %p44
        %p390 = pneg %p68
        %p391 = pneg %p65
        %p392 = pneg %p89
        %p393 = pneg %p86
        %p394 = pneg %p110
        %p395 = pneg %p107
        %p396 = pneg %p131
        %p397 = pneg %p128
        %p398 = pneg %p152
        %p399 = pneg %p149
        %p400 = pneg %p173
        %p401 = pneg %p170
        %p402 = pneg %p194
        %p403 = pneg %p191
        %p404 = pneg %p215
        %p405 = pneg %p212
        %p406 = pneg %p236
        %p407 = pneg %p233
        %p408 = pneg %p257
        %p409 = pneg %p254
        %s410 = smul.u32 32, %s26
        %p411 = scmp.lt.s32.totalorder %s410, 127
        %s412 = scalar_select %p411, %s410, 127
        %s413 = smul.addr %s412, 4
        %s414 = scalar_lea.vmem %s11, %s413
        %p415 = pneg %p283
        %p416 = pneg %p280
        %p417 = pneg %p309
        %p418 = pneg %p306
        %s419 = sand.u32 %s296, 1
        %s420 = scalar_lea.sflag [#allocation3], %s419
        %s421 = sand.u32 %s296, 1
        %s422 = smul.addr %s421, 256
        %s423 = scalar_lea.vmem [#allocation2], %s422
        %s424 = smul.u32 32, %s26
        %p425 = scmp.lt.s32.totalorder %s424, 127
        %s426 = scalar_select %p425, %s424, 127
        %s427 = smul.addr %s426, 4
        %s428 = scalar_lea.vmem %s0, %s427
        %s429 = smul.u32 32, %s26
        %s430 = smul.u32 32, %s26
        %p431 = scmp.lt.s32.totalorder %s430, 127
        %s432 = scalar_select %p431, %s430, 127
        %s433 = smul.addr %s432, 4
        %s434 = scalar_lea.vmem %s11, %s433
        %s435 = smul.u32 32, %s26
        %s436 = smul.u32 32, %s26
        %v438 = vld [vmem:[%s428] sm:$0xf]
        %v439 = vld [vmem:[%s428 + $0x4] sm:$0xf]
        %v440 = vld [vmem:[%s428 + $0x8] sm:$0xf]
        %v441 = vld [vmem:[%s428 + $0xc] sm:$0xf]
        %v442 = vld [vmem:[%s428 + $0x10] sm:$0xf]
        %v443 = vld [vmem:[%s428 + $0x14] sm:$0xf]
        %v444 = vld [vmem:[%s428 + $0x18] sm:$0xf]
        %v445 = vld [vmem:[%s428 + $0x1c] sm:$0xf]
        %v446 = vld [vmem:[%s428 + $0x20] sm:$0xf]
        %v447 = vld [vmem:[%s428 + $0x24] sm:$0xf]
        %v448 = vld [vmem:[%s428 + $0x28] sm:$0xf]
        %v449 = vld [vmem:[%s428 + $0x2c] sm:$0xf]
        %v450 = vld [vmem:[%s428 + $0x30] sm:$0xf]
        %v451 = vld [vmem:[%s428 + $0x34] sm:$0xf]
        %v452 = vld [vmem:[%s428 + $0x38] sm:$0xf]
        %v453 = vld [vmem:[%s428 + $0x3c] sm:$0xf]
        %v454 = vld [vmem:[%s428 + $0x40] sm:$0xf]
        %v455 = vld [vmem:[%s428 + $0x44] sm:$0xf]
        %v456 = vld [vmem:[%s428 + $0x48] sm:$0xf]
        %v457 = vld [vmem:[%s428 + $0x4c] sm:$0xf]
        %v458 = vld [vmem:[%s428 + $0x50] sm:$0xf]
        %v459 = vld [vmem:[%s428 + $0x54] sm:$0xf]
        %v460 = vld [vmem:[%s428 + $0x58] sm:$0xf]
        %v461 = vld [vmem:[%s428 + $0x5c] sm:$0xf]
        %v462 = vld [vmem:[%s428 + $0x60] sm:$0xf]
        %v463 = vld [vmem:[%s428 + $0x64] sm:$0xf]
        %v464 = vld [vmem:[%s428 + $0x68] sm:$0xf]
        %v465 = vld [vmem:[%s428 + $0x6c] sm:$0xf]
        %v466 = vld [vmem:[%s428 + $0x70] sm:$0xf]
        %v467 = vld [vmem:[%s428 + $0x74] sm:$0xf]
        %v468 = vld [vmem:[%s428 + $0x78] sm:$0xf]
        %v469 = vld [vmem:[%s428 + $0x7c] sm:$0xf]
        %v470 = vld [vmem:[%s1] sm:$0xf]
        %v471 = vld [vmem:[%s1 + $0x4] sm:$0xf]
        %v472 = vld [vmem:[%s1 + $0x8] sm:$0xf]
        %v473 = vld [vmem:[%s1 + $0xc] sm:$0xf]
        %v474 = vld [vmem:[%s1 + $0x10] sm:$0xf]
        %v475 = vld [vmem:[%s1 + $0x14] sm:$0xf]
        %v476 = vld [vmem:[%s1 + $0x18] sm:$0xf]
        %v477 = vld [vmem:[%s1 + $0x1c] sm:$0xf]
        %v510 = vunpack.c.l.b16 %v438
        %v511 = vunpack.c.l.b16 %v439
        %v512 = vunpack.c.l.b16 %v440
        %v513 = vunpack.c.l.b16 %v441
        %v514 = vunpack.c.l.b16 %v442
        %v515 = vunpack.c.l.b16 %v443
        %v516 = vunpack.c.l.b16 %v444
        %v517 = vunpack.c.l.b16 %v445
        %v518 = vunpack.c.l.b16 %v446
        %v519 = vunpack.c.l.b16 %v447
        %v520 = vunpack.c.l.b16 %v448
        %v521 = vunpack.c.l.b16 %v449
        %v522 = vunpack.c.l.b16 %v450
        %v523 = vunpack.c.l.b16 %v451
        %v524 = vunpack.c.l.b16 %v452
        %v525 = vunpack.c.l.b16 %v453
        %v526 = vunpack.c.l.b16 %v454
        %v527 = vunpack.c.l.b16 %v455
        %v528 = vunpack.c.l.b16 %v456
        %v529 = vunpack.c.l.b16 %v457
        %v530 = vunpack.c.l.b16 %v458
        %v531 = vunpack.c.l.b16 %v459
        %v532 = vunpack.c.l.b16 %v460
        %v533 = vunpack.c.l.b16 %v461
        %v534 = vunpack.c.l.b16 %v462
        %v535 = vunpack.c.l.b16 %v463
        %v536 = vunpack.c.l.b16 %v464
        %v537 = vunpack.c.l.b16 %v465
        %v538 = vunpack.c.l.b16 %v466
        %v539 = vunpack.c.l.b16 %v467
        %v540 = vunpack.c.l.b16 %v468
        %v541 = vunpack.c.l.b16 %v469
        %v542 = vpack.c.b16 %v511, %v510
        %v543 = vpack.c.b16 %v513, %v512
        %v544 = vpack.c.b16 %v515, %v514
        %v545 = vpack.c.b16 %v517, %v516
        %v546 = vpack.c.b16 %v519, %v518
        %v547 = vpack.c.b16 %v521, %v520
        %v548 = vpack.c.b16 %v523, %v522
        %v549 = vpack.c.b16 %v525, %v524
        %v550 = vpack.c.b16 %v527, %v526
        %v551 = vpack.c.b16 %v529, %v528
        %v552 = vpack.c.b16 %v531, %v530
        %v553 = vpack.c.b16 %v533, %v532
        %v554 = vpack.c.b16 %v535, %v534
        %v555 = vpack.c.b16 %v537, %v536
        %v556 = vpack.c.b16 %v539, %v538
        %v557 = vpack.c.b16 %v541, %v540
        %v566 = vunpack.c.l.b16 %v470
        %v567 = vunpack.c.l.b16 %v471
        %v568 = vunpack.c.l.b16 %v472
        %v569 = vunpack.c.l.b16 %v473
        %v570 = vunpack.c.l.b16 %v474
        %v571 = vunpack.c.l.b16 %v475
        %v572 = vunpack.c.l.b16 %v476
        %v573 = vunpack.c.l.b16 %v477
        %v574 = vpack.c.b16 %v567, %v566
        %v575 = vpack.c.b16 %v569, %v568
        %v576 = vpack.c.b16 %v571, %v570
        %v577 = vpack.c.b16 %v573, %v572
        %vm582 = vcmask 523264
        %v584 = vsel %vm582, %v542, 0
        %v587 = vsel %vm582, %v543, 0
        %v590 = vsel %vm582, %v544, 0
        %v593 = vsel %vm582, %v545, 0
        %v596 = vsel %vm582, %v546, 0
        %v599 = vsel %vm582, %v547, 0
        %v602 = vsel %vm582, %v548, 0
        %v605 = vsel %vm582, %v549, 0
        %v608 = vsel %vm582, %v550, 0
        %v611 = vsel %vm582, %v551, 0
        %v614 = vsel %vm582, %v552, 0
        %v617 = vsel %vm582, %v553, 0
        %v620 = vsel %vm582, %v554, 0
        %v623 = vsel %vm582, %v555, 0
        %v626 = vsel %vm582, %v556, 0
        %v629 = vsel %vm582, %v557, 0
        %631 = vmatprep.subr.bf16.mxu0 0
        %632 = vmatpush1.bf16.msra.mxu0 %v574
        %633 = vmatprep.subr.bf16.mxu0 0
        %634 = vmatpush1.bf16.msra.mxu0 %v575
        %635 = vmatprep.subr.bf16.mxu0 0
        %636 = vmatpush1.bf16.msra.mxu0 %v576
        %637 = vmatprep.subr.bf16.mxu0 0
        %638 = vmatpush1.bf16.msra.mxu0 %v577
        %639 = vmatprep.subr.bf16.mxu0 0
        %640 = vmatpush1.bf16.msra.mxu0 0
        %641 = vmatprep.subr.bf16.mxu0 0
        %642 = vmatpush1.bf16.msra.mxu0 0
        %643 = vmatprep.subr.bf16.mxu0 0
        %644 = vmatpush1.bf16.msra.mxu0 0
        %645 = vmatprep.subr.bf16.mxu0 0
        %646 = vmatpush1.bf16.msra.mxu0 0
        %647 = vmatprep.subr.bf16.mxu0 0
        %648 = vmatpush1.bf16.msra.mxu0 0
        %649 = vmatprep.subr.bf16.mxu0 0
        %650 = vmatpush1.bf16.msra.mxu0 0
        %651 = vmatprep.subr.bf16.mxu0 0
        %652 = vmatpush1.bf16.msra.mxu0 0
        %653 = vmatprep.subr.bf16.mxu0 0
        %654 = vmatpush1.bf16.msra.mxu0 0
        %655 = vmatprep.subr.bf16.mxu0 0
        %656 = vmatpush1.bf16.msra.mxu0 0
        %657 = vmatprep.subr.bf16.mxu0 0
        %658 = vmatpush1.bf16.msra.mxu0 0
        %659 = vmatprep.subr.bf16.mxu0 0
        %660 = vmatpush1.bf16.msra.mxu0 0
        %661 = vmatprep.subr.bf16.mxu0 0
        %662 = vmatpush1.bf16.msra.mxu0 0
        %663 = vmatprep.mubr.bf16.mxu0 0
        %664 = vmatmul.mubr.bf16.gmra.mrb[0].mxu0 %v584
        %v665 = vpop.f32.mrb[0].mxu0
        %v666 = vadd.f32 0.0, %v665
        %v667 = vpop.f32.mrb[0].mxu0
        %v668 = vpop.f32.mrb[0].mxu0
        %v669 = vadd.f32 0.0, %v668
        %v670 = vpop.f32.mrb[0].mxu0
        %671 = vmatprep.mubr.bf16.mxu0 0
        %672 = vmatmul.mubr.bf16.gmra.mrb[0].mxu0 %v587
        %v673 = vpop.f32.mrb[0].mxu0
        %v674 = vadd.f32 0.0, %v673
        %v675 = vpop.f32.mrb[0].mxu0
        %v676 = vpop.f32.mrb[0].mxu0
        %v677 = vadd.f32 0.0, %v676
        %v678 = vpop.f32.mrb[0].mxu0
        %679 = vmatprep.mubr.bf16.mxu0 0
        %680 = vmatmul.mubr.bf16.gmra.mrb[0].mxu0 %v590
        %v681 = vpop.f32.mrb[0].mxu0
        %v682 = vadd.f32 0.0, %v681
        %v683 = vpop.f32.mrb[0].mxu0
        %v684 = vpop.f32.mrb[0].mxu0
        %v685 = vadd.f32 0.0, %v684
        %v686 = vpop.f32.mrb[0].mxu0
        %687 = vmatprep.mubr.bf16.mxu0 0
        %688 = vmatmul.mubr.bf16.gmra.mrb[0].mxu0 %v593
        %v689 = vpop.f32.mrb[0].mxu0
        %v690 = vadd.f32 0.0, %v689
        %v691 = vpop.f32.mrb[0].mxu0
        %v692 = vpop.f32.mrb[0].mxu0
        %v693 = vadd.f32 0.0, %v692
        %v694 = vpop.f32.mrb[0].mxu0
        %695 = vmatprep.mubr.bf16.mxu0 0
        %696 = vmatmul.mubr.bf16.gmra.mrb[0].mxu0 %v596
        %v697 = vpop.f32.mrb[0].mxu0
        %v698 = vadd.f32 0.0, %v697
        %v699 = vpop.f32.mrb[0].mxu0
        %v700 = vpop.f32.mrb[0].mxu0
        %v701 = vadd.f32 0.0, %v700
        %v702 = vpop.f32.mrb[0].mxu0
        %703 = vmatprep.mubr.bf16.mxu0 0
        %704 = vmatmul.mubr.bf16.gmra.mrb[0].mxu0 %v599
        %v705 = vpop.f32.mrb[0].mxu0
        %v706 = vadd.f32 0.0, %v705
        %v707 = vpop.f32.mrb[0].mxu0
        %v708 = vpop.f32.mrb[0].mxu0
        %v709 = vadd.f32 0.0, %v708
        %v710 = vpop.f32.mrb[0].mxu0
        %711 = vmatprep.mubr.bf16.mxu0 0
        %712 = vmatmul.mubr.bf16.gmra.mrb[0].mxu0 %v602
        %v713 = vpop.f32.mrb[0].mxu0
        %v714 = vadd.f32 0.0, %v713
        %v715 = vpop.f32.mrb[0].mxu0
        %v716 = vpop.f32.mrb[0].mxu0
        %v717 = vadd.f32 0.0, %v716
        %v718 = vpop.f32.mrb[0].mxu0
        %719 = vmatprep.mubr.bf16.mxu0 0
        %720 = vmatmul.mubr.bf16.gmra.mrb[0].mxu0 %v605
        %v721 = vpop.f32.mrb[0].mxu0
        %v722 = vadd.f32 0.0, %v721
        %v723 = vpop.f32.mrb[0].mxu0
        %v724 = vpop.f32.mrb[0].mxu0
        %v725 = vadd.f32 0.0, %v724
        %v726 = vpop.f32.mrb[0].mxu0
        %727 = vmatprep.mubr.bf16.mxu0 0
        %728 = vmatmul.mubr.bf16.gmra.mrb[0].mxu0 %v608
        %v729 = vpop.f32.mrb[0].mxu0
        %v730 = vadd.f32 0.0, %v729
        %v731 = vpop.f32.mrb[0].mxu0
        %v732 = vpop.f32.mrb[0].mxu0
        %v733 = vadd.f32 0.0, %v732
        %v734 = vpop.f32.mrb[0].mxu0
        %735 = vmatprep.mubr.bf16.mxu0 0
        %736 = vmatmul.mubr.bf16.gmra.mrb[0].mxu0 %v611
        %v737 = vpop.f32.mrb[0].mxu0
        %v738 = vadd.f32 0.0, %v737
        %v739 = vpop.f32.mrb[0].mxu0
        %v740 = vpop.f32.mrb[0].mxu0
        %v741 = vadd.f32 0.0, %v740
        %v742 = vpop.f32.mrb[0].mxu0
        %743 = vmatprep.mubr.bf16.mxu0 0
        %744 = vmatmul.mubr.bf16.gmra.mrb[0].mxu0 %v614
        %v745 = vpop.f32.mrb[0].mxu0
        %v746 = vadd.f32 0.0, %v745
        %v747 = vpop.f32.mrb[0].mxu0
        %v748 = vpop.f32.mrb[0].mxu0
        %v749 = vadd.f32 0.0, %v748
        %v750 = vpop.f32.mrb[0].mxu0
        %751 = vmatprep.mubr.bf16.mxu0 0
        %752 = vmatmul.mubr.bf16.gmra.mrb[0].mxu0 %v617
        %v753 = vpop.f32.mrb[0].mxu0
        %v754 = vadd.f32 0.0, %v753
        %v755 = vpop.f32.mrb[0].mxu0
        %v756 = vpop.f32.mrb[0].mxu0
        %v757 = vadd.f32 0.0, %v756
        %v758 = vpop.f32.mrb[0].mxu0
        %759 = vmatprep.mubr.bf16.mxu0 0
        %760 = vmatmul.mubr.bf16.gmra.mrb[0].mxu0 %v620
        %v761 = vpop.f32.mrb[0].mxu0
        %v762 = vadd.f32 0.0, %v761
        %v763 = vpop.f32.mrb[0].mxu0
        %v764 = vpop.f32.mrb[0].mxu0
        %v765 = vadd.f32 0.0, %v764
        %v766 = vpop.f32.mrb[0].mxu0
        %767 = vmatprep.mubr.bf16.mxu0 0
        %768 = vmatmul.mubr.bf16.gmra.mrb[0].mxu0 %v623
        %v769 = vpop.f32.mrb[0].mxu0
        %v770 = vadd.f32 0.0, %v769
        %v771 = vpop.f32.mrb[0].mxu0
        %v772 = vpop.f32.mrb[0].mxu0
        %v773 = vadd.f32 0.0, %v772
        %v774 = vpop.f32.mrb[0].mxu0
        %775 = vmatprep.mubr.bf16.mxu0 0
        %776 = vmatmul.mubr.bf16.gmra.mrb[0].mxu0 %v626
        %v777 = vpop.f32.mrb[0].mxu0
        %v778 = vadd.f32 0.0, %v777
        %v779 = vpop.f32.mrb[0].mxu0
        %v780 = vpop.f32.mrb[0].mxu0
        %v781 = vadd.f32 0.0, %v780
        %v782 = vpop.f32.mrb[0].mxu0
        %783 = vmatprep.mubr.bf16.mxu0 0
        %784 = vmatmul.mubr.bf16.gmra.mrb[0].mxu0 %v629
        %v785 = vpop.f32.mrb[0].mxu0
        %v786 = vadd.f32 0.0, %v785
        %v787 = vpop.f32.mrb[0].mxu0
        %v788 = vpop.f32.mrb[0].mxu0
        %v789 = vadd.f32 0.0, %v788
        %v790 = vpop.f32.mrb[0].mxu0
        %791 = vdwg.mxu0
        %v792 = vand.u32 2147483647, %v666
        %v793 = vand.u32 2147483647, %v669
        %v794 = vand.u32 2147483647, %v674
        %v795 = vand.u32 2147483647, %v677
        %v796 = vand.u32 2147483647, %v682
        %v797 = vand.u32 2147483647, %v685
        %v798 = vand.u32 2147483647, %v690
        %v799 = vand.u32 2147483647, %v693
        %v800 = vand.u32 2147483647, %v698
        %v801 = vand.u32 2147483647, %v701
        %v802 = vand.u32 2147483647, %v706
        %v803 = vand.u32 2147483647, %v709
        %v804 = vand.u32 2147483647, %v714
        %v805 = vand.u32 2147483647, %v717
        %v806 = vand.u32 2147483647, %v722
        %v807 = vand.u32 2147483647, %v725
        %v808 = vand.u32 2147483647, %v730
        %v809 = vand.u32 2147483647, %v733
        %v810 = vand.u32 2147483647, %v738
        %v811 = vand.u32 2147483647, %v741
        %v812 = vand.u32 2147483647, %v746
        %v813 = vand.u32 2147483647, %v749
        %v814 = vand.u32 2147483647, %v754
        %v815 = vand.u32 2147483647, %v757
        %v816 = vand.u32 2147483647, %v762
        %v817 = vand.u32 2147483647, %v765
        %v818 = vand.u32 2147483647, %v770
        %v819 = vand.u32 2147483647, %v773
        %v820 = vand.u32 2147483647, %v778
        %v821 = vand.u32 2147483647, %v781
        %v822 = vand.u32 2147483647, %v786
        %v823 = vand.u32 2147483647, %v789
        %vm824 = vcmask 64512
        %v825 = vsel %vm824, %v792, 0.0
        %826 = vadd.xlane.f32.xlu0 %v825
        %v827 = vpop.xlane.xlu0 %826
        %v828 = vsel %vm824, %v793, 0.0
        %829 = vadd.xlane.f32.xlu0 %v828
        %v830 = vpop.xlane.xlu0 %829
        %v831 = vsel %vm824, %v794, 0.0
        %832 = vadd.xlane.f32.xlu0 %v831
        %v833 = vpop.xlane.xlu0 %832
        %v834 = vsel %vm824, %v795, 0.0
        %835 = vadd.xlane.f32.xlu0 %v834
        %v836 = vpop.xlane.xlu0 %835
        %v837 = vsel %vm824, %v796, 0.0
        %838 = vadd.xlane.f32.xlu0 %v837
        %v839 = vpop.xlane.xlu0 %838
        %v840 = vsel %vm824, %v797, 0.0
        %841 = vadd.xlane.f32.xlu0 %v840
        %v842 = vpop.xlane.xlu0 %841
        %v843 = vsel %vm824, %v798, 0.0
        %844 = vadd.xlane.f32.xlu0 %v843
        %v845 = vpop.xlane.xlu0 %844
        %v846 = vsel %vm824, %v799, 0.0
        %847 = vadd.xlane.f32.xlu0 %v846
        %v848 = vpop.xlane.xlu0 %847
        %v849 = vsel %vm824, %v800, 0.0
        %850 = vadd.xlane.f32.xlu0 %v849
        %v851 = vpop.xlane.xlu0 %850
        %v852 = vsel %vm824, %v801, 0.0
        %853 = vadd.xlane.f32.xlu0 %v852
        %v854 = vpop.xlane.xlu0 %853
        %v855 = vsel %vm824, %v802, 0.0
        %856 = vadd.xlane.f32.xlu0 %v855
        %v857 = vpop.xlane.xlu0 %856
        %v858 = vsel %vm824, %v803, 0.0
        %859 = vadd.xlane.f32.xlu0 %v858
        %v860 = vpop.xlane.xlu0 %859
        %v861 = vsel %vm824, %v804, 0.0
        %862 = vadd.xlane.f32.xlu0 %v861
        %v863 = vpop.xlane.xlu0 %862
        %v864 = vsel %vm824, %v805, 0.0
        %865 = vadd.xlane.f32.xlu0 %v864
        %v866 = vpop.xlane.xlu0 %865
        %v867 = vsel %vm824, %v806, 0.0
        %868 = vadd.xlane.f32.xlu0 %v867
        %v869 = vpop.xlane.xlu0 %868
        %v870 = vsel %vm824, %v807, 0.0
        %871 = vadd.xlane.f32.xlu0 %v870
        %v872 = vpop.xlane.xlu0 %871
        %v873 = vsel %vm824, %v808, 0.0
        %874 = vadd.xlane.f32.xlu0 %v873
        %v875 = vpop.xlane.xlu0 %874
        %v876 = vsel %vm824, %v809, 0.0
        %877 = vadd.xlane.f32.xlu0 %v876
        %v878 = vpop.xlane.xlu0 %877
        %v879 = vsel %vm824, %v810, 0.0
        %880 = vadd.xlane.f32.xlu0 %v879
        %v881 = vpop.xlane.xlu0 %880
        %v882 = vsel %vm824, %v811, 0.0
        %883 = vadd.xlane.f32.xlu0 %v882
        %v884 = vpop.xlane.xlu0 %883
        %v885 = vsel %vm824, %v812, 0.0
        %886 = vadd.xlane.f32.xlu0 %v885
        %v887 = vpop.xlane.xlu0 %886
        %v888 = vsel %vm824, %v813, 0.0
        %889 = vadd.xlane.f32.xlu0 %v888
        %v890 = vpop.xlane.xlu0 %889
        %v891 = vsel %vm824, %v814, 0.0
        %892 = vadd.xlane.f32.xlu0 %v891
        %v893 = vpop.xlane.xlu0 %892
        %v894 = vsel %vm824, %v815, 0.0
        %895 = vadd.xlane.f32.xlu0 %v894
        %v896 = vpop.xlane.xlu0 %895
        %v897 = vsel %vm824, %v816, 0.0
        %898 = vadd.xlane.f32.xlu0 %v897
        %v899 = vpop.xlane.xlu0 %898
        %v900 = vsel %vm824, %v817, 0.0
        %901 = vadd.xlane.f32.xlu0 %v900
        %v902 = vpop.xlane.xlu0 %901
        %v903 = vsel %vm824, %v818, 0.0
        %904 = vadd.xlane.f32.xlu0 %v903
        %v905 = vpop.xlane.xlu0 %904
        %v906 = vsel %vm824, %v819, 0.0
        %907 = vadd.xlane.f32.xlu0 %v906
        %v908 = vpop.xlane.xlu0 %907
        %v909 = vsel %vm824, %v820, 0.0
        %910 = vadd.xlane.f32.xlu0 %v909
        %v911 = vpop.xlane.xlu0 %910
        %v912 = vsel %vm824, %v821, 0.0
        %913 = vadd.xlane.f32.xlu0 %v912
        %v914 = vpop.xlane.xlu0 %913
        %v915 = vsel %vm824, %v822, 0.0
        %916 = vadd.xlane.f32.xlu0 %v915
        %v917 = vpop.xlane.xlu0 %916
        %v918 = vsel %vm824, %v823, 0.0
        %919 = vadd.xlane.f32.xlu0 %v918
        %v920 = vpop.xlane.xlu0 %919
        %v921 = vmax.f32 %v827, 1e-12
        %v922 = vmax.f32 %v830, 1e-12
        %v923 = vmax.f32 %v833, 1e-12
        %v924 = vmax.f32 %v836, 1e-12
        %v925 = vmax.f32 %v839, 1e-12
        %v926 = vmax.f32 %v842, 1e-12
        %v927 = vmax.f32 %v845, 1e-12
        %v928 = vmax.f32 %v848, 1e-12
        %v929 = vmax.f32 %v851, 1e-12
        %v930 = vmax.f32 %v854, 1e-12
        %v931 = vmax.f32 %v857, 1e-12
        %v932 = vmax.f32 %v860, 1e-12
        %v933 = vmax.f32 %v863, 1e-12
        %v934 = vmax.f32 %v866, 1e-12
        %v935 = vmax.f32 %v869, 1e-12
        %v936 = vmax.f32 %v872, 1e-12
        %v937 = vmax.f32 %v875, 1e-12
        %v938 = vmax.f32 %v878, 1e-12
        %v939 = vmax.f32 %v881, 1e-12
        %v940 = vmax.f32 %v884, 1e-12
        %v941 = vmax.f32 %v887, 1e-12
        %v942 = vmax.f32 %v890, 1e-12
        %v943 = vmax.f32 %v893, 1e-12
        %v944 = vmax.f32 %v896, 1e-12
        %v945 = vmax.f32 %v899, 1e-12
        %v946 = vmax.f32 %v902, 1e-12
        %v947 = vmax.f32 %v905, 1e-12
        %v948 = vmax.f32 %v908, 1e-12
        %v949 = vmax.f32 %v911, 1e-12
        %v950 = vmax.f32 %v914, 1e-12
        %v951 = vmax.f32 %v917, 1e-12
        %v952 = vmax.f32 %v920, 1e-12
        %v953 = vrcp.pop %v921
        %v954 = vrcp.pop %v922
        %v955 = vrcp.pop %v923
        %v956 = vrcp.pop %v924
        %v957 = vrcp.pop %v925
        %v958 = vrcp.pop %v926
        %v959 = vrcp.pop %v927
        %v960 = vrcp.pop %v928
        %v961 = vrcp.pop %v929
        %v962 = vrcp.pop %v930
        %v963 = vrcp.pop %v931
        %v964 = vrcp.pop %v932
        %v965 = vrcp.pop %v933
        %v966 = vrcp.pop %v934
        %v967 = vrcp.pop %v935
        %v968 = vrcp.pop %v936
        %v969 = vrcp.pop %v937
        %v970 = vrcp.pop %v938
        %v971 = vrcp.pop %v939
        %v972 = vrcp.pop %v940
        %v973 = vrcp.pop %v941
        %v974 = vrcp.pop %v942
        %v975 = vrcp.pop %v943
        %v976 = vrcp.pop %v944
        %v977 = vrcp.pop %v945
        %v978 = vrcp.pop %v946
        %v979 = vrcp.pop %v947
        %v980 = vrcp.pop %v948
        %v981 = vrcp.pop %v949
        %v982 = vrcp.pop %v950
        %v983 = vrcp.pop %v951
        %v984 = vrcp.pop %v952
        %v985 = vmul.f32 %v666, %v953
        %v986 = vmul.f32 %v669, %v954
        %v987 = vmul.f32 %v674, %v955
        %v988 = vmul.f32 %v677, %v956
        %v989 = vmul.f32 %v682, %v957
        %v990 = vmul.f32 %v685, %v958
        %v991 = vmul.f32 %v690, %v959
        %v992 = vmul.f32 %v693, %v960
        %v993 = vmul.f32 %v698, %v961
        %v994 = vmul.f32 %v701, %v962
        %v995 = vmul.f32 %v706, %v963
        %v996 = vmul.f32 %v709, %v964
        %v997 = vmul.f32 %v714, %v965
        %v998 = vmul.f32 %v717, %v966
        %v999 = vmul.f32 %v722, %v967
        %v1000 = vmul.f32 %v725, %v968
        %v1001 = vmul.f32 %v730, %v969
        %v1002 = vmul.f32 %v733, %v970
        %v1003 = vmul.f32 %v738, %v971
        %v1004 = vmul.f32 %v741, %v972
        %v1005 = vmul.f32 %v746, %v973
        %v1006 = vmul.f32 %v749, %v974
        %v1007 = vmul.f32 %v754, %v975
        %v1008 = vmul.f32 %v757, %v976
        %v1009 = vmul.f32 %v762, %v977
        %v1010 = vmul.f32 %v765, %v978
        %v1011 = vmul.f32 %v770, %v979
        %v1012 = vmul.f32 %v773, %v980
        %v1013 = vmul.f32 %v778, %v981
        %v1014 = vmul.f32 %v781, %v982
        %v1015 = vmul.f32 %v786, %v983
        %v1016 = vmul.f32 %v789, %v984
        %v1017 = vpack.c.bf16 %v986, %v985
        %v1018 = vpack.c.bf16 %v988, %v987
        %v1019 = vpack.c.bf16 %v990, %v989
        %v1020 = vpack.c.bf16 %v992, %v991
        %v1021 = vpack.c.bf16 %v994, %v993
        %v1022 = vpack.c.bf16 %v996, %v995
        %v1023 = vpack.c.bf16 %v998, %v997
        %v1024 = vpack.c.bf16 %v1000, %v999
        %v1025 = vpack.c.bf16 %v1002, %v1001
        %v1026 = vpack.c.bf16 %v1004, %v1003
        %v1027 = vpack.c.bf16 %v1006, %v1005
        %v1028 = vpack.c.bf16 %v1008, %v1007
        %v1029 = vpack.c.bf16 %v1010, %v1009
        %v1030 = vpack.c.bf16 %v1012, %v1011
        %v1031 = vpack.c.bf16 %v1014, %v1013
        %v1032 = vpack.c.bf16 %v1016, %v1015
        %v1033 = vld [vmem:[%s2] sm:$0xf]
        %v1034 = vld [vmem:[%s2 + $0x4] sm:$0xf]
        %v1035 = vld [vmem:[%s2 + $0x8] sm:$0xf]
        %v1036 = vld [vmem:[%s2 + $0xc] sm:$0xf]
        %v1037 = vld [vmem:[%s2 + $0x10] sm:$0xf]
        %v1038 = vld [vmem:[%s2 + $0x14] sm:$0xf]
        %v1039 = vld [vmem:[%s2 + $0x18] sm:$0xf]
        %v1040 = vld [vmem:[%s2 + $0x1c] sm:$0xf]
        %v1041 = vld [vmem:[%s3] sm:$0xf]
        %v1043 = vsel %vm824, %v1017, 0
        %v1046 = vsel %vm824, %v1018, 0
        %v1049 = vsel %vm824, %v1019, 0
        %v1052 = vsel %vm824, %v1020, 0
        %v1055 = vsel %vm824, %v1021, 0
        %v1058 = vsel %vm824, %v1022, 0
        %v1061 = vsel %vm824, %v1023, 0
        %v1064 = vsel %vm824, %v1024, 0
        %v1067 = vsel %vm824, %v1025, 0
        %v1070 = vsel %vm824, %v1026, 0
        %v1073 = vsel %vm824, %v1027, 0
        %v1076 = vsel %vm824, %v1028, 0
        %v1079 = vsel %vm824, %v1029, 0
        %v1082 = vsel %vm824, %v1030, 0
        %v1085 = vsel %vm824, %v1031, 0
        %v1088 = vsel %vm824, %v1032, 0
        %vm1090 = vcmask 1043456
        %v1092 = vsel %vm1090, %v1041, 0
        %1094 = vmatprep.subr.bf16.mxu0 0
        %1095 = vmatpush1.bf16.msra.mxu0 %v1092
        %1096 = vmatprep.subr.bf16.mxu0 0
        %1097 = vmatpush1.bf16.msra.mxu0 0
        %1098 = vmatprep.subr.bf16.mxu0 0
        %1099 = vmatpush1.bf16.msra.mxu0 0
        %1100 = vmatprep.subr.bf16.mxu0 0
        %1101 = vmatpush1.bf16.msra.mxu0 0
        %1102 = vmatprep.subr.bf16.mxu0 0
        %1103 = vmatpush1.bf16.msra.mxu0 0
        %1104 = vmatprep.subr.bf16.mxu0 0
        %1105 = vmatpush1.bf16.msra.mxu0 0
        %1106 = vmatprep.subr.bf16.mxu0 0
        %1107 = vmatpush1.bf16.msra.mxu0 0
        %1108 = vmatprep.subr.bf16.mxu0 0
        %1109 = vmatpush1.bf16.msra.mxu0 0
        %1110 = vmatprep.subr.bf16.mxu0 0
        %1111 = vmatpush1.bf16.msra.mxu0 0
        %1112 = vmatprep.subr.bf16.mxu0 0
        %1113 = vmatpush1.bf16.msra.mxu0 0
        %1114 = vmatprep.subr.bf16.mxu0 0
        %1115 = vmatpush1.bf16.msra.mxu0 0
        %1116 = vmatprep.subr.bf16.mxu0 0
        %1117 = vmatpush1.bf16.msra.mxu0 0
        %1118 = vmatprep.subr.bf16.mxu0 0
        %1119 = vmatpush1.bf16.msra.mxu0 0
        %1120 = vmatprep.subr.bf16.mxu0 0
        %1121 = vmatpush1.bf16.msra.mxu0 0
        %1122 = vmatprep.subr.bf16.mxu0 0
        %1123 = vmatpush1.bf16.msra.mxu0 0
        %1124 = vmatprep.subr.bf16.mxu0 0
        %1125 = vmatpush1.bf16.msra.mxu0 0
        %1126 = vmatprep.mubr.bf16.mxu0 0
        %1127 = vmatmul.mubr.bf16.gmra.mrb[0].mxu0 %v1043
        %v1128 = vpop.f32.mrb[0].mxu0
        %v1129 = vadd.f32 0.0, %v1128
        %v1130 = vpop.f32.mrb[0].mxu0
        %v1131 = vpop.f32.mrb[0].mxu0
        %v1132 = vadd.f32 0.0, %v1131
        %v1133 = vpop.f32.mrb[0].mxu0
        %1134 = vmatprep.mubr.bf16.mxu0 0
        %1135 = vmatmul.mubr.bf16.gmra.mrb[0].mxu0 %v1046
        %v1136 = vpop.f32.mrb[0].mxu0
        %v1137 = vadd.f32 0.0, %v1136
        %v1138 = vpop.f32.mrb[0].mxu0
        %v1139 = vpop.f32.mrb[0].mxu0
        %v1140 = vadd.f32 0.0, %v1139
        %v1141 = vpop.f32.mrb[0].mxu0
        %1142 = vmatprep.mubr.bf16.mxu0 0
        %1143 = vmatmul.mubr.bf16.gmra.mrb[0].mxu0 %v1049
        %v1144 = vpop.f32.mrb[0].mxu0
        %v1145 = vadd.f32 0.0, %v1144
        %v1146 = vpop.f32.mrb[0].mxu0
        %v1147 = vpop.f32.mrb[0].mxu0
        %v1148 = vadd.f32 0.0, %v1147
        %v1149 = vpop.f32.mrb[0].mxu0
        %1150 = vmatprep.mubr.bf16.mxu0 0
        %1151 = vmatmul.mubr.bf16.gmra.mrb[0].mxu0 %v1052
        %v1152 = vpop.f32.mrb[0].mxu0
        %v1153 = vadd.f32 0.0, %v1152
        %v1154 = vpop.f32.mrb[0].mxu0
        %v1155 = vpop.f32.mrb[0].mxu0
        %v1156 = vadd.f32 0.0, %v1155
        %v1157 = vpop.f32.mrb[0].mxu0
        %1158 = vmatprep.mubr.bf16.mxu0 0
        %1159 = vmatmul.mubr.bf16.gmra.mrb[0].mxu0 %v1055
        %v1160 = vpop.f32.mrb[0].mxu0
        %v1161 = vadd.f32 0.0, %v1160
        %v1162 = vpop.f32.mrb[0].mxu0
        %v1163 = vpop.f32.mrb[0].mxu0
        %v1164 = vadd.f32 0.0, %v1163
        %v1165 = vpop.f32.mrb[0].mxu0
        %1166 = vmatprep.mubr.bf16.mxu0 0
        %1167 = vmatmul.mubr.bf16.gmra.mrb[0].mxu0 %v1058
        %v1168 = vpop.f32.mrb[0].mxu0
        %v1169 = vadd.f32 0.0, %v1168
        %v1170 = vpop.f32.mrb[0].mxu0
        %v1171 = vpop.f32.mrb[0].mxu0
        %v1172 = vadd.f32 0.0, %v1171
        %v1173 = vpop.f32.mrb[0].mxu0
        %1174 = vmatprep.mubr.bf16.mxu0 0
        %1175 = vmatmul.mubr.bf16.gmra.mrb[0].mxu0 %v1061
        %v1176 = vpop.f32.mrb[0].mxu0
        %v1177 = vadd.f32 0.0, %v1176
        %v1178 = vpop.f32.mrb[0].mxu0
        %v1179 = vpop.f32.mrb[0].mxu0
        %v1180 = vadd.f32 0.0, %v1179
        %v1181 = vpop.f32.mrb[0].mxu0
        %1182 = vmatprep.mubr.bf16.mxu0 0
        %1183 = vmatmul.mubr.bf16.gmra.mrb[0].mxu0 %v1064
        %v1184 = vpop.f32.mrb[0].mxu0
        %v1185 = vadd.f32 0.0, %v1184
        %v1186 = vpop.f32.mrb[0].mxu0
        %v1187 = vpop.f32.mrb[0].mxu0
        %v1188 = vadd.f32 0.0, %v1187
        %v1189 = vpop.f32.mrb[0].mxu0
        %1190 = vmatprep.mubr.bf16.mxu0 0
        %1191 = vmatmul.mubr.bf16.gmra.mrb[0].mxu0 %v1067
        %v1192 = vpop.f32.mrb[0].mxu0
        %v1193 = vadd.f32 0.0, %v1192
        %v1194 = vpop.f32.mrb[0].mxu0
        %v1195 = vpop.f32.mrb[0].mxu0
        %v1196 = vadd.f32 0.0, %v1195
        %v1197 = vpop.f32.mrb[0].mxu0
        %1198 = vmatprep.mubr.bf16.mxu0 0
        %1199 = vmatmul.mubr.bf16.gmra.mrb[0].mxu0 %v1070
        %v1200 = vpop.f32.mrb[0].mxu0
        %v1201 = vadd.f32 0.0, %v1200
        %v1202 = vpop.f32.mrb[0].mxu0
        %v1203 = vpop.f32.mrb[0].mxu0
        %v1204 = vadd.f32 0.0, %v1203
        %v1205 = vpop.f32.mrb[0].mxu0
        %1206 = vmatprep.mubr.bf16.mxu0 0
        %1207 = vmatmul.mubr.bf16.gmra.mrb[0].mxu0 %v1073
        %v1208 = vpop.f32.mrb[0].mxu0
        %v1209 = vadd.f32 0.0, %v1208
        %v1210 = vpop.f32.mrb[0].mxu0
        %v1211 = vpop.f32.mrb[0].mxu0
        %v1212 = vadd.f32 0.0, %v1211
        %v1213 = vpop.f32.mrb[0].mxu0
        %1214 = vmatprep.mubr.bf16.mxu0 0
        %1215 = vmatmul.mubr.bf16.gmra.mrb[0].mxu0 %v1076
        %v1216 = vpop.f32.mrb[0].mxu0
        %v1217 = vadd.f32 0.0, %v1216
        %v1218 = vpop.f32.mrb[0].mxu0
        %v1219 = vpop.f32.mrb[0].mxu0
        %v1220 = vadd.f32 0.0, %v1219
        %v1221 = vpop.f32.mrb[0].mxu0
        %1222 = vmatprep.mubr.bf16.mxu0 0
        %1223 = vmatmul.mubr.bf16.gmra.mrb[0].mxu0 %v1079
        %v1224 = vpop.f32.mrb[0].mxu0
        %v1225 = vadd.f32 0.0, %v1224
        %v1226 = vpop.f32.mrb[0].mxu0
        %v1227 = vpop.f32.mrb[0].mxu0
        %v1228 = vadd.f32 0.0, %v1227
        %v1229 = vpop.f32.mrb[0].mxu0
        %1230 = vmatprep.mubr.bf16.mxu0 0
        %1231 = vmatmul.mubr.bf16.gmra.mrb[0].mxu0 %v1082
        %v1232 = vpop.f32.mrb[0].mxu0
        %v1233 = vadd.f32 0.0, %v1232
        %v1234 = vpop.f32.mrb[0].mxu0
        %v1235 = vpop.f32.mrb[0].mxu0
        %v1236 = vadd.f32 0.0, %v1235
        %v1237 = vpop.f32.mrb[0].mxu0
        %1238 = vmatprep.mubr.bf16.mxu0 0
        %1239 = vmatmul.mubr.bf16.gmra.mrb[0].mxu0 %v1085
        %v1240 = vpop.f32.mrb[0].mxu0
        %v1241 = vadd.f32 0.0, %v1240
        %v1242 = vpop.f32.mrb[0].mxu0
        %v1243 = vpop.f32.mrb[0].mxu0
        %v1244 = vadd.f32 0.0, %v1243
        %v1245 = vpop.f32.mrb[0].mxu0
        %1246 = vmatprep.mubr.bf16.mxu0 0
        %1247 = vmatmul.mubr.bf16.gmra.mrb[0].mxu0 %v1088
        %v1248 = vpop.f32.mrb[0].mxu0
        %v1249 = vadd.f32 0.0, %v1248
        %v1250 = vpop.f32.mrb[0].mxu0
        %v1251 = vpop.f32.mrb[0].mxu0
        %v1252 = vadd.f32 0.0, %v1251
        %v1253 = vpop.f32.mrb[0].mxu0
        %1254 = vdwg.mxu0
        %v1263 = vunpack.c.l.b16 %v1033
        %v1264 = vunpack.c.l.b16 %v1034
        %v1265 = vunpack.c.l.b16 %v1035
        %v1266 = vunpack.c.l.b16 %v1036
        %v1267 = vunpack.c.l.b16 %v1037
        %v1268 = vunpack.c.l.b16 %v1038
        %v1269 = vunpack.c.l.b16 %v1039
        %v1270 = vunpack.c.l.b16 %v1040
        %v1271 = vpack.c.b16 %v1264, %v1263
        %v1272 = vpack.c.b16 %v1266, %v1265
        %v1273 = vpack.c.b16 %v1268, %v1267
        %v1274 = vpack.c.b16 %v1270, %v1269
        %1279 = vmatprep.subr.bf16.mxu0 0
        %1280 = vmatpush1.bf16.msra.mxu0 %v1271
        %1281 = vmatprep.subr.bf16.mxu0 0
        %1282 = vmatpush1.bf16.msra.mxu0 %v1272
        %1283 = vmatprep.subr.bf16.mxu0 0
        %1284 = vmatpush1.bf16.msra.mxu0 %v1273
        %1285 = vmatprep.subr.bf16.mxu0 0
        %1286 = vmatpush1.bf16.msra.mxu0 %v1274
        %1287 = vmatprep.subr.bf16.mxu0 0
        %1288 = vmatpush1.bf16.msra.mxu0 0
        %1289 = vmatprep.subr.bf16.mxu0 0
        %1290 = vmatpush1.bf16.msra.mxu0 0
        %1291 = vmatprep.subr.bf16.mxu0 0
        %1292 = vmatpush1.bf16.msra.mxu0 0
        %1293 = vmatprep.subr.bf16.mxu0 0
        %1294 = vmatpush1.bf16.msra.mxu0 0
        %1295 = vmatprep.subr.bf16.mxu0 0
        %1296 = vmatpush1.bf16.msra.mxu0 0
        %1297 = vmatprep.subr.bf16.mxu0 0
        %1298 = vmatpush1.bf16.msra.mxu0 0
        %1299 = vmatprep.subr.bf16.mxu0 0
        %1300 = vmatpush1.bf16.msra.mxu0 0
        %1301 = vmatprep.subr.bf16.mxu0 0
        %1302 = vmatpush1.bf16.msra.mxu0 0
        %1303 = vmatprep.subr.bf16.mxu0 0
        %1304 = vmatpush1.bf16.msra.mxu0 0
        %1305 = vmatprep.subr.bf16.mxu0 0
        %1306 = vmatpush1.bf16.msra.mxu0 0
        %1307 = vmatprep.subr.bf16.mxu0 0
        %1308 = vmatpush1.bf16.msra.mxu0 0
        %1309 = vmatprep.subr.bf16.mxu0 0
        %1310 = vmatpush1.bf16.msra.mxu0 0
        %1311 = vmatprep.mubr.bf16.mxu0 0
        %1312 = vmatmul.mubr.bf16.gmra.mrb[0].mxu0 %v584
        %v1313 = vpop.f32.mrb[0].mxu0
        %v1314 = vadd.f32 %v1129, %v1313
        %v1315 = vpop.f32.mrb[0].mxu0
        %v1316 = vpop.f32.mrb[0].mxu0
        %v1317 = vadd.f32 %v1132, %v1316
        %v1318 = vpop.f32.mrb[0].mxu0
        %1319 = vmatprep.mubr.bf16.mxu0 0
        %1320 = vmatmul.mubr.bf16.gmra.mrb[0].mxu0 %v587
        %v1321 = vpop.f32.mrb[0].mxu0
        %v1322 = vadd.f32 %v1137, %v1321
        %v1323 = vpop.f32.mrb[0].mxu0
        %v1324 = vpop.f32.mrb[0].mxu0
        %v1325 = vadd.f32 %v1140, %v1324
        %v1326 = vpop.f32.mrb[0].mxu0
        %1327 = vmatprep.mubr.bf16.mxu0 0
        %1328 = vmatmul.mubr.bf16.gmra.mrb[0].mxu0 %v590
        %v1329 = vpop.f32.mrb[0].mxu0
        %v1330 = vadd.f32 %v1145, %v1329
        %v1331 = vpop.f32.mrb[0].mxu0
        %v1332 = vpop.f32.mrb[0].mxu0
        %v1333 = vadd.f32 %v1148, %v1332
        %v1334 = vpop.f32.mrb[0].mxu0
        %1335 = vmatprep.mubr.bf16.mxu0 0
        %1336 = vmatmul.mubr.bf16.gmra.mrb[0].mxu0 %v593
        %v1337 = vpop.f32.mrb[0].mxu0
        %v1338 = vadd.f32 %v1153, %v1337
        %v1339 = vpop.f32.mrb[0].mxu0
        %v1340 = vpop.f32.mrb[0].mxu0
        %v1341 = vadd.f32 %v1156, %v1340
        %v1342 = vpop.f32.mrb[0].mxu0
        %1343 = vmatprep.mubr.bf16.mxu0 0
        %1344 = vmatmul.mubr.bf16.gmra.mrb[0].mxu0 %v596
        %v1345 = vpop.f32.mrb[0].mxu0
        %v1346 = vadd.f32 %v1161, %v1345
        %v1347 = vpop.f32.mrb[0].mxu0
        %v1348 = vpop.f32.mrb[0].mxu0
        %v1349 = vadd.f32 %v1164, %v1348
        %v1350 = vpop.f32.mrb[0].mxu0
        %1351 = vmatprep.mubr.bf16.mxu0 0
        %1352 = vmatmul.mubr.bf16.gmra.mrb[0].mxu0 %v599
        %v1353 = vpop.f32.mrb[0].mxu0
        %v1354 = vadd.f32 %v1169, %v1353
        %v1355 = vpop.f32.mrb[0].mxu0
        %v1356 = vpop.f32.mrb[0].mxu0
        %v1357 = vadd.f32 %v1172, %v1356
        %v1358 = vpop.f32.mrb[0].mxu0
        %1359 = vmatprep.mubr.bf16.mxu0 0
        %1360 = vmatmul.mubr.bf16.gmra.mrb[0].mxu0 %v602
        %v1361 = vpop.f32.mrb[0].mxu0
        %v1362 = vadd.f32 %v1177, %v1361
        %v1363 = vpop.f32.mrb[0].mxu0
        %v1364 = vpop.f32.mrb[0].mxu0
        %v1365 = vadd.f32 %v1180, %v1364
        %v1366 = vpop.f32.mrb[0].mxu0
        %1367 = vmatprep.mubr.bf16.mxu0 0
        %1368 = vmatmul.mubr.bf16.gmra.mrb[0].mxu0 %v605
        %v1369 = vpop.f32.mrb[0].mxu0
        %v1370 = vadd.f32 %v1185, %v1369
        %v1371 = vpop.f32.mrb[0].mxu0
        %v1372 = vpop.f32.mrb[0].mxu0
        %v1373 = vadd.f32 %v1188, %v1372
        %v1374 = vpop.f32.mrb[0].mxu0
        %1375 = vmatprep.mubr.bf16.mxu0 0
        %1376 = vmatmul.mubr.bf16.gmra.mrb[0].mxu0 %v608
        %v1377 = vpop.f32.mrb[0].mxu0
        %v1378 = vadd.f32 %v1193, %v1377
        %v1379 = vpop.f32.mrb[0].mxu0
        %v1380 = vpop.f32.mrb[0].mxu0
        %v1381 = vadd.f32 %v1196, %v1380
        %v1382 = vpop.f32.mrb[0].mxu0
        %1383 = vmatprep.mubr.bf16.mxu0 0
        %1384 = vmatmul.mubr.bf16.gmra.mrb[0].mxu0 %v611
        %v1385 = vpop.f32.mrb[0].mxu0
        %v1386 = vadd.f32 %v1201, %v1385
        %v1387 = vpop.f32.mrb[0].mxu0
        %v1388 = vpop.f32.mrb[0].mxu0
        %v1389 = vadd.f32 %v1204, %v1388
        %v1390 = vpop.f32.mrb[0].mxu0
        %1391 = vmatprep.mubr.bf16.mxu0 0
        %1392 = vmatmul.mubr.bf16.gmra.mrb[0].mxu0 %v614
        %v1393 = vpop.f32.mrb[0].mxu0
        %v1394 = vadd.f32 %v1209, %v1393
        %v1395 = vpop.f32.mrb[0].mxu0
        %v1396 = vpop.f32.mrb[0].mxu0
        %v1397 = vadd.f32 %v1212, %v1396
        %v1398 = vpop.f32.mrb[0].mxu0
        %1399 = vmatprep.mubr.bf16.mxu0 0
        %1400 = vmatmul.mubr.bf16.gmra.mrb[0].mxu0 %v617
        %v1401 = vpop.f32.mrb[0].mxu0
        %v1402 = vadd.f32 %v1217, %v1401
        %v1403 = vpop.f32.mrb[0].mxu0
        %v1404 = vpop.f32.mrb[0].mxu0
        %v1405 = vadd.f32 %v1220, %v1404
        %v1406 = vpop.f32.mrb[0].mxu0
        %1407 = vmatprep.mubr.bf16.mxu0 0
        %1408 = vmatmul.mubr.bf16.gmra.mrb[0].mxu0 %v620
        %v1409 = vpop.f32.mrb[0].mxu0
        %v1410 = vadd.f32 %v1225, %v1409
        %v1411 = vpop.f32.mrb[0].mxu0
        %v1412 = vpop.f32.mrb[0].mxu0
        %v1413 = vadd.f32 %v1228, %v1412
        %v1414 = vpop.f32.mrb[0].mxu0
        %1415 = vmatprep.mubr.bf16.mxu0 0
        %1416 = vmatmul.mubr.bf16.gmra.mrb[0].mxu0 %v623
        %v1417 = vpop.f32.mrb[0].mxu0
        %v1418 = vadd.f32 %v1233, %v1417
        %v1419 = vpop.f32.mrb[0].mxu0
        %v1420 = vpop.f32.mrb[0].mxu0
        %v1421 = vadd.f32 %v1236, %v1420
        %v1422 = vpop.f32.mrb[0].mxu0
        %1423 = vmatprep.mubr.bf16.mxu0 0
        %1424 = vmatmul.mubr.bf16.gmra.mrb[0].mxu0 %v626
        %v1425 = vpop.f32.mrb[0].mxu0
        %v1426 = vadd.f32 %v1241, %v1425
        %v1427 = vpop.f32.mrb[0].mxu0
        %v1428 = vpop.f32.mrb[0].mxu0
        %v1429 = vadd.f32 %v1244, %v1428
        %v1430 = vpop.f32.mrb[0].mxu0
        %1431 = vmatprep.mubr.bf16.mxu0 0
        %1432 = vmatmul.mubr.bf16.gmra.mrb[0].mxu0 %v629
        %v1433 = vpop.f32.mrb[0].mxu0
        %v1434 = vadd.f32 %v1249, %v1433
        %v1435 = vpop.f32.mrb[0].mxu0
        %v1436 = vpop.f32.mrb[0].mxu0
        %v1437 = vadd.f32 %v1252, %v1436
        %v1438 = vpop.f32.mrb[0].mxu0
        %1439 = vdwg.mxu0
        %v1440 = vld [vmem:[%s4] sm:$0x1]
        %v1442 = vlaneseq
        %v1443 = vshrl.u32 %v1442, 7
        %v1444 = vsub.s32 0, %v1443
        %v1445 = vrot.slane %v1440, %v1444
        %v1447 = vadd.f32 %v1314, %v1445
        %v1448 = vadd.f32 %v1317, %v1445
        %v1449 = vadd.f32 %v1322, %v1445
        %v1450 = vadd.f32 %v1325, %v1445
        %v1451 = vadd.f32 %v1330, %v1445
        %v1452 = vadd.f32 %v1333, %v1445
        %v1453 = vadd.f32 %v1338, %v1445
        %v1454 = vadd.f32 %v1341, %v1445
        %v1455 = vadd.f32 %v1346, %v1445
        %v1456 = vadd.f32 %v1349, %v1445
        %v1457 = vadd.f32 %v1354, %v1445
        %v1458 = vadd.f32 %v1357, %v1445
        %v1459 = vadd.f32 %v1362, %v1445
        %v1460 = vadd.f32 %v1365, %v1445
        %v1461 = vadd.f32 %v1370, %v1445
        %v1462 = vadd.f32 %v1373, %v1445
        %v1463 = vadd.f32 %v1378, %v1445
        %v1464 = vadd.f32 %v1381, %v1445
        %v1465 = vadd.f32 %v1386, %v1445
        %v1466 = vadd.f32 %v1389, %v1445
        %v1467 = vadd.f32 %v1394, %v1445
        %v1468 = vadd.f32 %v1397, %v1445
        %v1469 = vadd.f32 %v1402, %v1445
        %v1470 = vadd.f32 %v1405, %v1445
        %v1471 = vadd.f32 %v1410, %v1445
        %v1472 = vadd.f32 %v1413, %v1445
        %v1473 = vadd.f32 %v1418, %v1445
        %v1474 = vadd.f32 %v1421, %v1445
        %v1475 = vadd.f32 %v1426, %v1445
        %v1476 = vadd.f32 %v1429, %v1445
        %v1477 = vadd.f32 %v1434, %v1445
        %v1478 = vadd.f32 %v1437, %v1445
        %v1479 = vmax.f32 %v1447, 0.0
        %v1480 = vmax.f32 %v1448, 0.0
        %v1481 = vmax.f32 %v1449, 0.0
        %v1482 = vmax.f32 %v1450, 0.0
        %v1483 = vmax.f32 %v1451, 0.0
        %v1484 = vmax.f32 %v1452, 0.0
        %v1485 = vmax.f32 %v1453, 0.0
        %v1486 = vmax.f32 %v1454, 0.0
        %v1487 = vmax.f32 %v1455, 0.0
        %v1488 = vmax.f32 %v1456, 0.0
        %v1489 = vmax.f32 %v1457, 0.0
        %v1490 = vmax.f32 %v1458, 0.0
        %v1491 = vmax.f32 %v1459, 0.0
        %v1492 = vmax.f32 %v1460, 0.0
        %v1493 = vmax.f32 %v1461, 0.0
        %v1494 = vmax.f32 %v1462, 0.0
        %v1495 = vmax.f32 %v1463, 0.0
        %v1496 = vmax.f32 %v1464, 0.0
        %v1497 = vmax.f32 %v1465, 0.0
        %v1498 = vmax.f32 %v1466, 0.0
        %v1499 = vmax.f32 %v1467, 0.0
        %v1500 = vmax.f32 %v1468, 0.0
        %v1501 = vmax.f32 %v1469, 0.0
        %v1502 = vmax.f32 %v1470, 0.0
        %v1503 = vmax.f32 %v1471, 0.0
        %v1504 = vmax.f32 %v1472, 0.0
        %v1505 = vmax.f32 %v1473, 0.0
        %v1506 = vmax.f32 %v1474, 0.0
        %v1507 = vmax.f32 %v1475, 0.0
        %v1508 = vmax.f32 %v1476, 0.0
        %v1509 = vmax.f32 %v1477, 0.0
        %v1510 = vmax.f32 %v1478, 0.0
        %v1511 = vpack.c.bf16 %v1480, %v1479
        %v1512 = vpack.c.bf16 %v1482, %v1481
        %v1513 = vpack.c.bf16 %v1484, %v1483
        %v1514 = vpack.c.bf16 %v1486, %v1485
        %v1515 = vpack.c.bf16 %v1488, %v1487
        %v1516 = vpack.c.bf16 %v1490, %v1489
        %v1517 = vpack.c.bf16 %v1492, %v1491
        %v1518 = vpack.c.bf16 %v1494, %v1493
        %v1519 = vpack.c.bf16 %v1496, %v1495
        %v1520 = vpack.c.bf16 %v1498, %v1497
        %v1521 = vpack.c.bf16 %v1500, %v1499
        %v1522 = vpack.c.bf16 %v1502, %v1501
        %v1523 = vpack.c.bf16 %v1504, %v1503
        %v1524 = vpack.c.bf16 %v1506, %v1505
        %v1525 = vpack.c.bf16 %v1508, %v1507
        %v1526 = vpack.c.bf16 %v1510, %v1509
        %v1527 = vld [vmem:[%s5] sm:$0xf]
        %v1528 = vld [vmem:[%s5 + $0x4] sm:$0xf]
        %v1529 = vld [vmem:[%s5 + $0x8] sm:$0xf]
        %v1530 = vld [vmem:[%s5 + $0xc] sm:$0xf]
        %v1531 = vld [vmem:[%s6] sm:$0x1]
        %v1533 = vlaneseq
        %v1534 = vshrl.u32 %v1533, 7
        %v1535 = vsub.s32 0, %v1534
        %v1536 = vrot.slane %v1531, %v1535
        %v1542 = vunpack.c.l.b16 %v1527
        %v1543 = vunpack.c.l.b16 %v1528
        %v1544 = vunpack.c.l.b16 %v1529
        %v1545 = vunpack.c.l.b16 %v1530
        %v1546 = vpack.c.b16 %v1543, %v1542
        %v1547 = vpack.c.b16 %v1545, %v1544
        %vm1550 = vcmask 261120
        %v1552 = vsel %vm1550, %v1511, 0
        %v1555 = vsel %vm1550, %v1512, 0
        %v1558 = vsel %vm1550, %v1513, 0
        %v1561 = vsel %vm1550, %v1514, 0
        %v1564 = vsel %vm1550, %v1515, 0
        %v1567 = vsel %vm1550, %v1516, 0
        %v1570 = vsel %vm1550, %v1517, 0
        %v1573 = vsel %vm1550, %v1518, 0
        %v1576 = vsel %vm1550, %v1519, 0
        %v1579 = vsel %vm1550, %v1520, 0
        %v1582 = vsel %vm1550, %v1521, 0
        %v1585 = vsel %vm1550, %v1522, 0
        %v1588 = vsel %vm1550, %v1523, 0
        %v1591 = vsel %vm1550, %v1524, 0
        %v1594 = vsel %vm1550, %v1525, 0
        %v1597 = vsel %vm1550, %v1526, 0
        %1599 = vmatprep.subr.bf16.mxu0 0
        %1600 = vmatpush1.bf16.msra.mxu0 %v1546
        %1601 = vmatprep.subr.bf16.mxu0 0
        %1602 = vmatpush1.bf16.msra.mxu0 %v1547
        %1603 = vmatprep.subr.bf16.mxu0 0
        %1604 = vmatpush1.bf16.msra.mxu0 0
        %1605 = vmatprep.subr.bf16.mxu0 0
        %1606 = vmatpush1.bf16.msra.mxu0 0
        %1607 = vmatprep.subr.bf16.mxu0 0
        %1608 = vmatpush1.bf16.msra.mxu0 0
        %1609 = vmatprep.subr.bf16.mxu0 0
        %1610 = vmatpush1.bf16.msra.mxu0 0
        %1611 = vmatprep.subr.bf16.mxu0 0
        %1612 = vmatpush1.bf16.msra.mxu0 0
        %1613 = vmatprep.subr.bf16.mxu0 0
        %1614 = vmatpush1.bf16.msra.mxu0 0
        %1615 = vmatprep.subr.bf16.mxu0 0
        %1616 = vmatpush1.bf16.msra.mxu0 0
        %1617 = vmatprep.subr.bf16.mxu0 0
        %1618 = vmatpush1.bf16.msra.mxu0 0
        %1619 = vmatprep.subr.bf16.mxu0 0
        %1620 = vmatpush1.bf16.msra.mxu0 0
        %1621 = vmatprep.subr.bf16.mxu0 0
        %1622 = vmatpush1.bf16.msra.mxu0 0
        %1623 = vmatprep.subr.bf16.mxu0 0
        %1624 = vmatpush1.bf16.msra.mxu0 0
        %1625 = vmatprep.subr.bf16.mxu0 0
        %1626 = vmatpush1.bf16.msra.mxu0 0
        %1627 = vmatprep.subr.bf16.mxu0 0
        %1628 = vmatpush1.bf16.msra.mxu0 0
        %1629 = vmatprep.subr.bf16.mxu0 0
        %1630 = vmatpush1.bf16.msra.mxu0 0
        %1631 = vmatprep.mubr.bf16.mxu0 0
        %1632 = vmatmul.mubr.bf16.gmra.mrb[0].mxu0 %v1552
        %v1633 = vpop.f32.mrb[0].mxu0
        %v1634 = vadd.f32 %v1536, %v1633
        %v1635 = vpop.f32.mrb[0].mxu0
        %v1636 = vpop.f32.mrb[0].mxu0
        %v1637 = vadd.f32 %v1536, %v1636
        %v1638 = vpop.f32.mrb[0].mxu0
        %1639 = vmatprep.mubr.bf16.mxu0 0
        %1640 = vmatmul.mubr.bf16.gmra.mrb[0].mxu0 %v1555
        %v1641 = vpop.f32.mrb[0].mxu0
        %v1642 = vadd.f32 %v1536, %v1641
        %v1643 = vpop.f32.mrb[0].mxu0
        %v1644 = vpop.f32.mrb[0].mxu0
        %v1645 = vadd.f32 %v1536, %v1644
        %v1646 = vpop.f32.mrb[0].mxu0
        %1647 = vmatprep.mubr.bf16.mxu0 0
        %1648 = vmatmul.mubr.bf16.gmra.mrb[0].mxu0 %v1558
        %v1649 = vpop.f32.mrb[0].mxu0
        %v1650 = vadd.f32 %v1536, %v1649
        %v1651 = vpop.f32.mrb[0].mxu0
        %v1652 = vpop.f32.mrb[0].mxu0
        %v1653 = vadd.f32 %v1536, %v1652
        %v1654 = vpop.f32.mrb[0].mxu0
        %1655 = vmatprep.mubr.bf16.mxu0 0
        %1656 = vmatmul.mubr.bf16.gmra.mrb[0].mxu0 %v1561
        %v1657 = vpop.f32.mrb[0].mxu0
        %v1658 = vadd.f32 %v1536, %v1657
        %v1659 = vpop.f32.mrb[0].mxu0
        %v1660 = vpop.f32.mrb[0].mxu0
        %v1661 = vadd.f32 %v1536, %v1660
        %v1662 = vpop.f32.mrb[0].mxu0
        %1663 = vmatprep.mubr.bf16.mxu0 0
        %1664 = vmatmul.mubr.bf16.gmra.mrb[0].mxu0 %v1564
        %v1665 = vpop.f32.mrb[0].mxu0
        %v1666 = vadd.f32 %v1536, %v1665
        %v1667 = vpop.f32.mrb[0].mxu0
        %v1668 = vpop.f32.mrb[0].mxu0
        %v1669 = vadd.f32 %v1536, %v1668
        %v1670 = vpop.f32.mrb[0].mxu0
        %1671 = vmatprep.mubr.bf16.mxu0 0
        %1672 = vmatmul.mubr.bf16.gmra.mrb[0].mxu0 %v1567
        %v1673 = vpop.f32.mrb[0].mxu0
        %v1674 = vadd.f32 %v1536, %v1673
        %v1675 = vpop.f32.mrb[0].mxu0
        %v1676 = vpop.f32.mrb[0].mxu0
        %v1677 = vadd.f32 %v1536, %v1676
        %v1678 = vpop.f32.mrb[0].mxu0
        %1679 = vmatprep.mubr.bf16.mxu0 0
        %1680 = vmatmul.mubr.bf16.gmra.mrb[0].mxu0 %v1570
        %v1681 = vpop.f32.mrb[0].mxu0
        %v1682 = vadd.f32 %v1536, %v1681
        %v1683 = vpop.f32.mrb[0].mxu0
        %v1684 = vpop.f32.mrb[0].mxu0
        %v1685 = vadd.f32 %v1536, %v1684
        %v1686 = vpop.f32.mrb[0].mxu0
        %1687 = vmatprep.mubr.bf16.mxu0 0
        %1688 = vmatmul.mubr.bf16.gmra.mrb[0].mxu0 %v1573
        %v1689 = vpop.f32.mrb[0].mxu0
        %v1690 = vadd.f32 %v1536, %v1689
        %v1691 = vpop.f32.mrb[0].mxu0
        %v1692 = vpop.f32.mrb[0].mxu0
        %v1693 = vadd.f32 %v1536, %v1692
        %v1694 = vpop.f32.mrb[0].mxu0
        %1695 = vmatprep.mubr.bf16.mxu0 0
        %1696 = vmatmul.mubr.bf16.gmra.mrb[0].mxu0 %v1576
        %v1697 = vpop.f32.mrb[0].mxu0
        %v1698 = vadd.f32 %v1536, %v1697
        %v1699 = vpop.f32.mrb[0].mxu0
        %v1700 = vpop.f32.mrb[0].mxu0
        %v1701 = vadd.f32 %v1536, %v1700
        %v1702 = vpop.f32.mrb[0].mxu0
        %1703 = vmatprep.mubr.bf16.mxu0 0
        %1704 = vmatmul.mubr.bf16.gmra.mrb[0].mxu0 %v1579
        %v1705 = vpop.f32.mrb[0].mxu0
        %v1706 = vadd.f32 %v1536, %v1705
        %v1707 = vpop.f32.mrb[0].mxu0
        %v1708 = vpop.f32.mrb[0].mxu0
        %v1709 = vadd.f32 %v1536, %v1708
        %v1710 = vpop.f32.mrb[0].mxu0
        %1711 = vmatprep.mubr.bf16.mxu0 0
        %1712 = vmatmul.mubr.bf16.gmra.mrb[0].mxu0 %v1582
        %v1713 = vpop.f32.mrb[0].mxu0
        %v1714 = vadd.f32 %v1536, %v1713
        %v1715 = vpop.f32.mrb[0].mxu0
        %v1716 = vpop.f32.mrb[0].mxu0
        %v1717 = vadd.f32 %v1536, %v1716
        %v1718 = vpop.f32.mrb[0].mxu0
        %1719 = vmatprep.mubr.bf16.mxu0 0
        %1720 = vmatmul.mubr.bf16.gmra.mrb[0].mxu0 %v1585
        %v1721 = vpop.f32.mrb[0].mxu0
        %v1722 = vadd.f32 %v1536, %v1721
        %v1723 = vpop.f32.mrb[0].mxu0
        %v1724 = vpop.f32.mrb[0].mxu0
        %v1725 = vadd.f32 %v1536, %v1724
        %v1726 = vpop.f32.mrb[0].mxu0
        %1727 = vmatprep.mubr.bf16.mxu0 0
        %1728 = vmatmul.mubr.bf16.gmra.mrb[0].mxu0 %v1588
        %v1729 = vpop.f32.mrb[0].mxu0
        %v1730 = vadd.f32 %v1536, %v1729
        %v1731 = vpop.f32.mrb[0].mxu0
        %v1732 = vpop.f32.mrb[0].mxu0
        %v1733 = vadd.f32 %v1536, %v1732
        %v1734 = vpop.f32.mrb[0].mxu0
        %1735 = vmatprep.mubr.bf16.mxu0 0
        %1736 = vmatmul.mubr.bf16.gmra.mrb[0].mxu0 %v1591
        %v1737 = vpop.f32.mrb[0].mxu0
        %v1738 = vadd.f32 %v1536, %v1737
        %v1739 = vpop.f32.mrb[0].mxu0
        %v1740 = vpop.f32.mrb[0].mxu0
        %v1741 = vadd.f32 %v1536, %v1740
        %v1742 = vpop.f32.mrb[0].mxu0
        %1743 = vmatprep.mubr.bf16.mxu0 0
        %1744 = vmatmul.mubr.bf16.gmra.mrb[0].mxu0 %v1594
        %v1745 = vpop.f32.mrb[0].mxu0
        %v1746 = vadd.f32 %v1536, %v1745
        %v1747 = vpop.f32.mrb[0].mxu0
        %v1748 = vpop.f32.mrb[0].mxu0
        %v1749 = vadd.f32 %v1536, %v1748
        %v1750 = vpop.f32.mrb[0].mxu0
        %1751 = vmatprep.mubr.bf16.mxu0 0
        %1752 = vmatmul.mubr.bf16.gmra.mrb[0].mxu0 %v1597
        %v1753 = vpop.f32.mrb[0].mxu0
        %v1754 = vadd.f32 %v1536, %v1753
        %v1755 = vpop.f32.mrb[0].mxu0
        %v1756 = vpop.f32.mrb[0].mxu0
        %v1757 = vadd.f32 %v1536, %v1756
        %v1758 = vpop.f32.mrb[0].mxu0
        %1759 = vdwg.mxu0
        %v1760 = vld [vmem:[%s434] sm:$0xf]
        %v1761 = vld [vmem:[%s434 + $0x4] sm:$0xf]
        %v1762 = vld [vmem:[%s434 + $0x8] sm:$0xf]
        %v1763 = vld [vmem:[%s434 + $0xc] sm:$0xf]
        %v1764 = vld [vmem:[%s434 + $0x10] sm:$0xf]
        %v1765 = vld [vmem:[%s434 + $0x14] sm:$0xf]
        %v1766 = vld [vmem:[%s434 + $0x18] sm:$0xf]
        %v1767 = vld [vmem:[%s434 + $0x1c] sm:$0xf]
        %v1768 = vld [vmem:[%s434 + $0x20] sm:$0xf]
        %v1769 = vld [vmem:[%s434 + $0x24] sm:$0xf]
        %v1770 = vld [vmem:[%s434 + $0x28] sm:$0xf]
        %v1771 = vld [vmem:[%s434 + $0x2c] sm:$0xf]
        %v1772 = vld [vmem:[%s434 + $0x30] sm:$0xf]
        %v1773 = vld [vmem:[%s434 + $0x34] sm:$0xf]
        %v1774 = vld [vmem:[%s434 + $0x38] sm:$0xf]
        %v1775 = vld [vmem:[%s434 + $0x3c] sm:$0xf]
        %v1776 = vld [vmem:[%s434 + $0x40] sm:$0xf]
        %v1777 = vld [vmem:[%s434 + $0x44] sm:$0xf]
        %v1778 = vld [vmem:[%s434 + $0x48] sm:$0xf]
        %v1779 = vld [vmem:[%s434 + $0x4c] sm:$0xf]
        %v1780 = vld [vmem:[%s434 + $0x50] sm:$0xf]
        %v1781 = vld [vmem:[%s434 + $0x54] sm:$0xf]
        %v1782 = vld [vmem:[%s434 + $0x58] sm:$0xf]
        %v1783 = vld [vmem:[%s434 + $0x5c] sm:$0xf]
        %v1784 = vld [vmem:[%s434 + $0x60] sm:$0xf]
        %v1785 = vld [vmem:[%s434 + $0x64] sm:$0xf]
        %v1786 = vld [vmem:[%s434 + $0x68] sm:$0xf]
        %v1787 = vld [vmem:[%s434 + $0x6c] sm:$0xf]
        %v1788 = vld [vmem:[%s434 + $0x70] sm:$0xf]
        %v1789 = vld [vmem:[%s434 + $0x74] sm:$0xf]
        %v1790 = vld [vmem:[%s434 + $0x78] sm:$0xf]
        %v1791 = vld [vmem:[%s434 + $0x7c] sm:$0xf]
        %v1792 = vunpack.c.l.bf16 %v1760
        %v1793 = vunpack.c.l.bf16 %v1761
        %v1794 = vunpack.c.l.bf16 %v1762
        %v1795 = vunpack.c.l.bf16 %v1763
        %v1796 = vunpack.c.l.bf16 %v1764
        %v1797 = vunpack.c.l.bf16 %v1765
        %v1798 = vunpack.c.l.bf16 %v1766
        %v1799 = vunpack.c.l.bf16 %v1767
        %v1800 = vunpack.c.l.bf16 %v1768
        %v1801 = vunpack.c.l.bf16 %v1769
        %v1802 = vunpack.c.l.bf16 %v1770
        %v1803 = vunpack.c.l.bf16 %v1771
        %v1804 = vunpack.c.l.bf16 %v1772
        %v1805 = vunpack.c.l.bf16 %v1773
        %v1806 = vunpack.c.l.bf16 %v1774
        %v1807 = vunpack.c.l.bf16 %v1775
        %v1808 = vunpack.c.l.bf16 %v1776
        %v1809 = vunpack.c.l.bf16 %v1777
        %v1810 = vunpack.c.l.bf16 %v1778
        %v1811 = vunpack.c.l.bf16 %v1779
        %v1812 = vunpack.c.l.bf16 %v1780
        %v1813 = vunpack.c.l.bf16 %v1781
        %v1814 = vunpack.c.l.bf16 %v1782
        %v1815 = vunpack.c.l.bf16 %v1783
        %v1816 = vunpack.c.l.bf16 %v1784
        %v1817 = vunpack.c.l.bf16 %v1785
        %v1818 = vunpack.c.l.bf16 %v1786
        %v1819 = vunpack.c.l.bf16 %v1787
        %v1820 = vunpack.c.l.bf16 %v1788
        %v1821 = vunpack.c.l.bf16 %v1789
        %v1822 = vunpack.c.l.bf16 %v1790
        %v1823 = vunpack.c.l.bf16 %v1791
        %v1824 = vmul.f32 %v1634, 0.5
        %v1825 = vmul.f32 %v1637, 0.5
        %v1826 = vmul.f32 %v1642, 0.5
        %v1827 = vmul.f32 %v1645, 0.5
        %v1828 = vmul.f32 %v1650, 0.5
        %v1829 = vmul.f32 %v1653, 0.5
        %v1830 = vmul.f32 %v1658, 0.5
        %v1831 = vmul.f32 %v1661, 0.5
        %v1832 = vmul.f32 %v1666, 0.5
        %v1833 = vmul.f32 %v1669, 0.5
        %v1834 = vmul.f32 %v1674, 0.5
        %v1835 = vmul.f32 %v1677, 0.5
        %v1836 = vmul.f32 %v1682, 0.5
        %v1837 = vmul.f32 %v1685, 0.5
        %v1838 = vmul.f32 %v1690, 0.5
        %v1839 = vmul.f32 %v1693, 0.5
        %v1840 = vmul.f32 %v1698, 0.5
        %v1841 = vmul.f32 %v1701, 0.5
        %v1842 = vmul.f32 %v1706, 0.5
        %v1843 = vmul.f32 %v1709, 0.5
        %v1844 = vmul.f32 %v1714, 0.5
        %v1845 = vmul.f32 %v1717, 0.5
        %v1846 = vmul.f32 %v1722, 0.5
        %v1847 = vmul.f32 %v1725, 0.5
        %v1848 = vmul.f32 %v1730, 0.5
        %v1849 = vmul.f32 %v1733, 0.5
        %v1850 = vmul.f32 %v1738, 0.5
        %v1851 = vmul.f32 %v1741, 0.5
        %v1852 = vmul.f32 %v1746, 0.5
        %v1853 = vmul.f32 %v1749, 0.5
        %v1854 = vmul.f32 %v1754, 0.5
        %v1855 = vmul.f32 %v1757, 0.5
        %v1856 = vmul.f32 %v1824, 1.442695
        %v1857 = vpow.pop %v1856
        %v1858 = vmul.f32 %v1825, 1.442695
        %v1859 = vpow.pop %v1858
        %v1860 = vmul.f32 %v1826, 1.442695
        %v1861 = vpow.pop %v1860
        %v1862 = vmul.f32 %v1827, 1.442695
        %v1863 = vpow.pop %v1862
        %v1864 = vmul.f32 %v1828, 1.442695
        %v1865 = vpow.pop %v1864
        %v1866 = vmul.f32 %v1829, 1.442695
        %v1867 = vpow.pop %v1866
        %v1868 = vmul.f32 %v1830, 1.442695
        %v1869 = vpow.pop %v1868
        %v1870 = vmul.f32 %v1831, 1.442695
        %v1871 = vpow.pop %v1870
        %v1872 = vmul.f32 %v1832, 1.442695
        %v1873 = vpow.pop %v1872
        %v1874 = vmul.f32 %v1833, 1.442695
        %v1875 = vpow.pop %v1874
        %v1876 = vmul.f32 %v1834, 1.442695
        %v1877 = vpow.pop %v1876
        %v1878 = vmul.f32 %v1835, 1.442695
        %v1879 = vpow.pop %v1878
        %v1880 = vmul.f32 %v1836, 1.442695
        %v1881 = vpow.pop %v1880
        %v1882 = vmul.f32 %v1837, 1.442695
        %v1883 = vpow.pop %v1882
        %v1884 = vmul.f32 %v1838, 1.442695
        %v1885 = vpow.pop %v1884
        %v1886 = vmul.f32 %v1839, 1.442695
        %v1887 = vpow.pop %v1886
        %v1888 = vmul.f32 %v1840, 1.442695
        %v1889 = vpow.pop %v1888
        %v1890 = vmul.f32 %v1841, 1.442695
        %v1891 = vpow.pop %v1890
        %v1892 = vmul.f32 %v1842, 1.442695
        %v1893 = vpow.pop %v1892
        %v1894 = vmul.f32 %v1843, 1.442695
        %v1895 = vpow.pop %v1894
        %v1896 = vmul.f32 %v1844, 1.442695
        %v1897 = vpow.pop %v1896
        %v1898 = vmul.f32 %v1845, 1.442695
        %v1899 = vpow.pop %v1898
        %v1900 = vmul.f32 %v1846, 1.442695
        %v1901 = vpow.pop %v1900
        %v1902 = vmul.f32 %v1847, 1.442695
        %v1903 = vpow.pop %v1902
        %v1904 = vmul.f32 %v1848, 1.442695
        %v1905 = vpow.pop %v1904
        %v1906 = vmul.f32 %v1849, 1.442695
        %v1907 = vpow.pop %v1906
        %v1908 = vmul.f32 %v1850, 1.442695
        %v1909 = vpow.pop %v1908
        %v1910 = vmul.f32 %v1851, 1.442695
        %v1911 = vpow.pop %v1910
        %v1912 = vmul.f32 %v1852, 1.442695
        %v1913 = vpow.pop %v1912
        %v1914 = vmul.f32 %v1853, 1.442695
        %v1915 = vpow.pop %v1914
        %v1916 = vmul.f32 %v1854, 1.442695
        %v1917 = vpow.pop %v1916
        %v1918 = vmul.f32 %v1855, 1.442695
        %v1919 = vpow.pop %v1918
        %1952 = vrot.lane.b32.xlu0 %v1857, 112
        %v1953 = vpop.permute.xlu0 %1952
        %1954 = vrot.lane.b32.xlu0 %v1859, 112
        %v1955 = vpop.permute.xlu0 %1954
        %1956 = vrot.lane.b32.xlu0 %v1861, 112
        %v1957 = vpop.permute.xlu0 %1956
        %1958 = vrot.lane.b32.xlu0 %v1863, 112
        %v1959 = vpop.permute.xlu0 %1958
        %1960 = vrot.lane.b32.xlu0 %v1865, 112
        %v1961 = vpop.permute.xlu0 %1960
        %1962 = vrot.lane.b32.xlu0 %v1867, 112
        %v1963 = vpop.permute.xlu0 %1962
        %1964 = vrot.lane.b32.xlu0 %v1869, 112
        %v1965 = vpop.permute.xlu0 %1964
        %1966 = vrot.lane.b32.xlu0 %v1871, 112
        %v1967 = vpop.permute.xlu0 %1966
        %1968 = vrot.lane.b32.xlu0 %v1873, 112
        %v1969 = vpop.permute.xlu0 %1968
        %1970 = vrot.lane.b32.xlu0 %v1875, 112
        %v1971 = vpop.permute.xlu0 %1970
        %1972 = vrot.lane.b32.xlu0 %v1877, 112
        %v1973 = vpop.permute.xlu0 %1972
        %1974 = vrot.lane.b32.xlu0 %v1879, 112
        %v1975 = vpop.permute.xlu0 %1974
        %1976 = vrot.lane.b32.xlu0 %v1881, 112
        %v1977 = vpop.permute.xlu0 %1976
        %1978 = vrot.lane.b32.xlu0 %v1883, 112
        %v1979 = vpop.permute.xlu0 %1978
        %1980 = vrot.lane.b32.xlu0 %v1885, 112
        %v1981 = vpop.permute.xlu0 %1980
        %1982 = vrot.lane.b32.xlu0 %v1887, 112
        %v1983 = vpop.permute.xlu0 %1982
        %1984 = vrot.lane.b32.xlu0 %v1889, 112
        %v1985 = vpop.permute.xlu0 %1984
        %1986 = vrot.lane.b32.xlu0 %v1891, 112
        %v1987 = vpop.permute.xlu0 %1986
        %1988 = vrot.lane.b32.xlu0 %v1893, 112
        %v1989 = vpop.permute.xlu0 %1988
        %1990 = vrot.lane.b32.xlu0 %v1895, 112
        %v1991 = vpop.permute.xlu0 %1990
        %1992 = vrot.lane.b32.xlu0 %v1897, 112
        %v1993 = vpop.permute.xlu0 %1992
        %1994 = vrot.lane.b32.xlu0 %v1899, 112
        %v1995 = vpop.permute.xlu0 %1994
        %1996 = vrot.lane.b32.xlu0 %v1901, 112
        %v1997 = vpop.permute.xlu0 %1996
        %1998 = vrot.lane.b32.xlu0 %v1903, 112
        %v1999 = vpop.permute.xlu0 %1998
        %2000 = vrot.lane.b32.xlu0 %v1905, 112
        %v2001 = vpop.permute.xlu0 %2000
        %2002 = vrot.lane.b32.xlu0 %v1907, 112
        %v2003 = vpop.permute.xlu0 %2002
        %2004 = vrot.lane.b32.xlu0 %v1909, 112
        %v2005 = vpop.permute.xlu0 %2004
        %2006 = vrot.lane.b32.xlu0 %v1911, 112
        %v2007 = vpop.permute.xlu0 %2006
        %2008 = vrot.lane.b32.xlu0 %v1913, 112
        %v2009 = vpop.permute.xlu0 %2008
        %2010 = vrot.lane.b32.xlu0 %v1915, 112
        %v2011 = vpop.permute.xlu0 %2010
        %2012 = vrot.lane.b32.xlu0 %v1917, 112
        %v2013 = vpop.permute.xlu0 %2012
        %2014 = vrot.lane.b32.xlu0 %v1919, 112
        %v2015 = vpop.permute.xlu0 %2014
        %v2048 = vmul.f32 %v1792, %v1953
        %v2049 = vmul.f32 %v1793, %v1955
        %v2050 = vmul.f32 %v1794, %v1957
        %v2051 = vmul.f32 %v1795, %v1959
        %v2052 = vmul.f32 %v1796, %v1961
        %v2053 = vmul.f32 %v1797, %v1963
        %v2054 = vmul.f32 %v1798, %v1965
        %v2055 = vmul.f32 %v1799, %v1967
        %v2056 = vmul.f32 %v1800, %v1969
        %v2057 = vmul.f32 %v1801, %v1971
        %v2058 = vmul.f32 %v1802, %v1973
        %v2059 = vmul.f32 %v1803, %v1975
        %v2060 = vmul.f32 %v1804, %v1977
        %v2061 = vmul.f32 %v1805, %v1979
        %v2062 = vmul.f32 %v1806, %v1981
        %v2063 = vmul.f32 %v1807, %v1983
        %v2064 = vmul.f32 %v1808, %v1985
        %v2065 = vmul.f32 %v1809, %v1987
        %v2066 = vmul.f32 %v1810, %v1989
        %v2067 = vmul.f32 %v1811, %v1991
        %v2068 = vmul.f32 %v1812, %v1993
        %v2069 = vmul.f32 %v1813, %v1995
        %v2070 = vmul.f32 %v1814, %v1997
        %v2071 = vmul.f32 %v1815, %v1999
        %v2072 = vmul.f32 %v1816, %v2001
        %v2073 = vmul.f32 %v1817, %v2003
        %v2074 = vmul.f32 %v1818, %v2005
        %v2075 = vmul.f32 %v1819, %v2007
        %v2076 = vmul.f32 %v1820, %v2009
        %v2077 = vmul.f32 %v1821, %v2011
        %v2078 = vmul.f32 %v1822, %v2013
        %v2079 = vmul.f32 %v1823, %v2015
        %v2080 = vadd.f32 %v2048, %v1634
        %v2081 = vadd.f32 %v2049, %v1637
        %v2082 = vadd.f32 %v2050, %v1642
        %v2083 = vadd.f32 %v2051, %v1645
        %v2084 = vadd.f32 %v2052, %v1650
        %v2085 = vadd.f32 %v2053, %v1653
        %v2086 = vadd.f32 %v2054, %v1658
        %v2087 = vadd.f32 %v2055, %v1661
        %v2088 = vadd.f32 %v2056, %v1666
        %v2089 = vadd.f32 %v2057, %v1669
        %v2090 = vadd.f32 %v2058, %v1674
        %v2091 = vadd.f32 %v2059, %v1677
        %v2092 = vadd.f32 %v2060, %v1682
        %v2093 = vadd.f32 %v2061, %v1685
        %v2094 = vadd.f32 %v2062, %v1690
        %v2095 = vadd.f32 %v2063, %v1693
        %v2096 = vadd.f32 %v2064, %v1698
        %v2097 = vadd.f32 %v2065, %v1701
        %v2098 = vadd.f32 %v2066, %v1706
        %v2099 = vadd.f32 %v2067, %v1709
        %v2100 = vadd.f32 %v2068, %v1714
        %v2101 = vadd.f32 %v2069, %v1717
        %v2102 = vadd.f32 %v2070, %v1722
        %v2103 = vadd.f32 %v2071, %v1725
        %v2104 = vadd.f32 %v2072, %v1730
        %v2105 = vadd.f32 %v2073, %v1733
        %v2106 = vadd.f32 %v2074, %v1738
        %v2107 = vadd.f32 %v2075, %v1741
        %v2108 = vadd.f32 %v2076, %v1746
        %v2109 = vadd.f32 %v2077, %v1749
        %v2110 = vadd.f32 %v2078, %v1754
        %v2111 = vadd.f32 %v2079, %v1757
        %v2112 = vpack.c.bf16 %v2081, %v2080
        %v2113 = vpack.c.bf16 %v2083, %v2082
        %v2114 = vpack.c.bf16 %v2085, %v2084
        %v2115 = vpack.c.bf16 %v2087, %v2086
        %v2116 = vpack.c.bf16 %v2089, %v2088
        %v2117 = vpack.c.bf16 %v2091, %v2090
        %v2118 = vpack.c.bf16 %v2093, %v2092
        %v2119 = vpack.c.bf16 %v2095, %v2094
        %v2120 = vpack.c.bf16 %v2097, %v2096
        %v2121 = vpack.c.bf16 %v2099, %v2098
        %v2122 = vpack.c.bf16 %v2101, %v2100
        %v2123 = vpack.c.bf16 %v2103, %v2102
        %v2124 = vpack.c.bf16 %v2105, %v2104
        %v2125 = vpack.c.bf16 %v2107, %v2106
        %v2126 = vpack.c.bf16 %v2109, %v2108
        %v2127 = vpack.c.bf16 %v2111, %v2110
        %v2128 = vld [vmem:[%s7] sm:$0xf]
        %v2129 = vld [vmem:[%s7 + $0x4] sm:$0xf]
        %v2130 = vld [vmem:[%s8] sm:$0x1]
        %v2132 = vlaneseq
        %v2133 = vshrl.u32 %v2132, 7
        %v2134 = vsub.s32 0, %v2133
        %v2135 = vrot.slane %v2130, %v2134
        %v2139 = vunpack.c.l.b16 %v2128
        %v2140 = vunpack.c.l.b16 %v2129
        %v2141 = vpack.c.b16 %v2140, %v2139
        %vm2143 = vcmask 130048
        %v2145 = vsel %vm2143, %v2112, 0
        %v2148 = vsel %vm2143, %v2113, 0
        %v2151 = vsel %vm2143, %v2114, 0
        %v2154 = vsel %vm2143, %v2115, 0
        %v2157 = vsel %vm2143, %v2116, 0
        %v2160 = vsel %vm2143, %v2117, 0
        %v2163 = vsel %vm2143, %v2118, 0
        %v2166 = vsel %vm2143, %v2119, 0
        %v2169 = vsel %vm2143, %v2120, 0
        %v2172 = vsel %vm2143, %v2121, 0
        %v2175 = vsel %vm2143, %v2122, 0
        %v2178 = vsel %vm2143, %v2123, 0
        %v2181 = vsel %vm2143, %v2124, 0
        %v2184 = vsel %vm2143, %v2125, 0
        %v2187 = vsel %vm2143, %v2126, 0
        %v2190 = vsel %vm2143, %v2127, 0
        %2192 = vmatprep.subr.bf16.mxu0 0
        %2193 = vmatpush1.bf16.msra.mxu0 %v2141
        %2194 = vmatprep.subr.bf16.mxu0 0
        %2195 = vmatpush1.bf16.msra.mxu0 0
        %2196 = vmatprep.subr.bf16.mxu0 0
        %2197 = vmatpush1.bf16.msra.mxu0 0
        %2198 = vmatprep.subr.bf16.mxu0 0
        %2199 = vmatpush1.bf16.msra.mxu0 0
        %2200 = vmatprep.subr.bf16.mxu0 0
        %2201 = vmatpush1.bf16.msra.mxu0 0
        %2202 = vmatprep.subr.bf16.mxu0 0
        %2203 = vmatpush1.bf16.msra.mxu0 0
        %2204 = vmatprep.subr.bf16.mxu0 0
        %2205 = vmatpush1.bf16.msra.mxu0 0
        %2206 = vmatprep.subr.bf16.mxu0 0
        %2207 = vmatpush1.bf16.msra.mxu0 0
        %2208 = vmatprep.subr.bf16.mxu0 0
        %2209 = vmatpush1.bf16.msra.mxu0 0
        %2210 = vmatprep.subr.bf16.mxu0 0
        %2211 = vmatpush1.bf16.msra.mxu0 0
        %2212 = vmatprep.subr.bf16.mxu0 0
        %2213 = vmatpush1.bf16.msra.mxu0 0
        %2214 = vmatprep.subr.bf16.mxu0 0
        %2215 = vmatpush1.bf16.msra.mxu0 0
        %2216 = vmatprep.subr.bf16.mxu0 0
        %2217 = vmatpush1.bf16.msra.mxu0 0
        %2218 = vmatprep.subr.bf16.mxu0 0
        %2219 = vmatpush1.bf16.msra.mxu0 0
        %2220 = vmatprep.subr.bf16.mxu0 0
        %2221 = vmatpush1.bf16.msra.mxu0 0
        %2222 = vmatprep.subr.bf16.mxu0 0
        %2223 = vmatpush1.bf16.msra.mxu0 0
        %2224 = vmatprep.mubr.bf16.mxu0 0
        %2225 = vmatmul.mubr.bf16.gmra.mrb[0].mxu0 %v2145
        %v2226 = vpop.f32.mrb[0].mxu0
        %v2227 = vadd.f32 %v2135, %v2226
        %v2228 = vpop.f32.mrb[0].mxu0
        %v2229 = vpop.f32.mrb[0].mxu0
        %v2230 = vadd.f32 %v2135, %v2229
        %v2231 = vpop.f32.mrb[0].mxu0
        %2232 = vmatprep.mubr.bf16.mxu0 0
        %2233 = vmatmul.mubr.bf16.gmra.mrb[0].mxu0 %v2148
        %v2234 = vpop.f32.mrb[0].mxu0
        %v2235 = vadd.f32 %v2135, %v2234
        %v2236 = vpop.f32.mrb[0].mxu0
        %v2237 = vpop.f32.mrb[0].mxu0
        %v2238 = vadd.f32 %v2135, %v2237
        %v2239 = vpop.f32.mrb[0].mxu0
        %2240 = vmatprep.mubr.bf16.mxu0 0
        %2241 = vmatmul.mubr.bf16.gmra.mrb[0].mxu0 %v2151
        %v2242 = vpop.f32.mrb[0].mxu0
        %v2243 = vadd.f32 %v2135, %v2242
        %v2244 = vpop.f32.mrb[0].mxu0
        %v2245 = vpop.f32.mrb[0].mxu0
        %v2246 = vadd.f32 %v2135, %v2245
        %v2247 = vpop.f32.mrb[0].mxu0
        %2248 = vmatprep.mubr.bf16.mxu0 0
        %2249 = vmatmul.mubr.bf16.gmra.mrb[0].mxu0 %v2154
        %v2250 = vpop.f32.mrb[0].mxu0
        %v2251 = vadd.f32 %v2135, %v2250
        %v2252 = vpop.f32.mrb[0].mxu0
        %v2253 = vpop.f32.mrb[0].mxu0
        %v2254 = vadd.f32 %v2135, %v2253
        %v2255 = vpop.f32.mrb[0].mxu0
        %2256 = vmatprep.mubr.bf16.mxu0 0
        %2257 = vmatmul.mubr.bf16.gmra.mrb[0].mxu0 %v2157
        %v2258 = vpop.f32.mrb[0].mxu0
        %v2259 = vadd.f32 %v2135, %v2258
        %v2260 = vpop.f32.mrb[0].mxu0
        %v2261 = vpop.f32.mrb[0].mxu0
        %v2262 = vadd.f32 %v2135, %v2261
        %v2263 = vpop.f32.mrb[0].mxu0
        %2264 = vmatprep.mubr.bf16.mxu0 0
        %2265 = vmatmul.mubr.bf16.gmra.mrb[0].mxu0 %v2160
        %v2266 = vpop.f32.mrb[0].mxu0
        %v2267 = vadd.f32 %v2135, %v2266
        %v2268 = vpop.f32.mrb[0].mxu0
        %v2269 = vpop.f32.mrb[0].mxu0
        %v2270 = vadd.f32 %v2135, %v2269
        %v2271 = vpop.f32.mrb[0].mxu0
        %2272 = vmatprep.mubr.bf16.mxu0 0
        %2273 = vmatmul.mubr.bf16.gmra.mrb[0].mxu0 %v2163
        %v2274 = vpop.f32.mrb[0].mxu0
        %v2275 = vadd.f32 %v2135, %v2274
        %v2276 = vpop.f32.mrb[0].mxu0
        %v2277 = vpop.f32.mrb[0].mxu0
        %v2278 = vadd.f32 %v2135, %v2277
        %v2279 = vpop.f32.mrb[0].mxu0
        %2280 = vmatprep.mubr.bf16.mxu0 0
        %2281 = vmatmul.mubr.bf16.gmra.mrb[0].mxu0 %v2166
        %v2282 = vpop.f32.mrb[0].mxu0
        %v2283 = vadd.f32 %v2135, %v2282
        %v2284 = vpop.f32.mrb[0].mxu0
        %v2285 = vpop.f32.mrb[0].mxu0
        %v2286 = vadd.f32 %v2135, %v2285
        %v2287 = vpop.f32.mrb[0].mxu0
        %2288 = vmatprep.mubr.bf16.mxu0 0
        %2289 = vmatmul.mubr.bf16.gmra.mrb[0].mxu0 %v2169
        %v2290 = vpop.f32.mrb[0].mxu0
        %v2291 = vadd.f32 %v2135, %v2290
        %v2292 = vpop.f32.mrb[0].mxu0
        %v2293 = vpop.f32.mrb[0].mxu0
        %v2294 = vadd.f32 %v2135, %v2293
        %v2295 = vpop.f32.mrb[0].mxu0
        %2296 = vmatprep.mubr.bf16.mxu0 0
        %2297 = vmatmul.mubr.bf16.gmra.mrb[0].mxu0 %v2172
        %v2298 = vpop.f32.mrb[0].mxu0
        %v2299 = vadd.f32 %v2135, %v2298
        %v2300 = vpop.f32.mrb[0].mxu0
        %v2301 = vpop.f32.mrb[0].mxu0
        %v2302 = vadd.f32 %v2135, %v2301
        %v2303 = vpop.f32.mrb[0].mxu0
        %2304 = vmatprep.mubr.bf16.mxu0 0
        %2305 = vmatmul.mubr.bf16.gmra.mrb[0].mxu0 %v2175
        %v2306 = vpop.f32.mrb[0].mxu0
        %v2307 = vadd.f32 %v2135, %v2306
        %v2308 = vpop.f32.mrb[0].mxu0
        %v2309 = vpop.f32.mrb[0].mxu0
        %v2310 = vadd.f32 %v2135, %v2309
        %v2311 = vpop.f32.mrb[0].mxu0
        %2312 = vmatprep.mubr.bf16.mxu0 0
        %2313 = vmatmul.mubr.bf16.gmra.mrb[0].mxu0 %v2178
        %v2314 = vpop.f32.mrb[0].mxu0
        %v2315 = vadd.f32 %v2135, %v2314
        %v2316 = vpop.f32.mrb[0].mxu0
        %v2317 = vpop.f32.mrb[0].mxu0
        %v2318 = vadd.f32 %v2135, %v2317
        %v2319 = vpop.f32.mrb[0].mxu0
        %2320 = vmatprep.mubr.bf16.mxu0 0
        %2321 = vmatmul.mubr.bf16.gmra.mrb[0].mxu0 %v2181
        %v2322 = vpop.f32.mrb[0].mxu0
        %v2323 = vadd.f32 %v2135, %v2322
        %v2324 = vpop.f32.mrb[0].mxu0
        %v2325 = vpop.f32.mrb[0].mxu0
        %v2326 = vadd.f32 %v2135, %v2325
        %v2327 = vpop.f32.mrb[0].mxu0
        %2328 = vmatprep.mubr.bf16.mxu0 0
        %2329 = vmatmul.mubr.bf16.gmra.mrb[0].mxu0 %v2184
        %v2330 = vpop.f32.mrb[0].mxu0
        %v2331 = vadd.f32 %v2135, %v2330
        %v2332 = vpop.f32.mrb[0].mxu0
        %v2333 = vpop.f32.mrb[0].mxu0
        %v2334 = vadd.f32 %v2135, %v2333
        %v2335 = vpop.f32.mrb[0].mxu0
        %2336 = vmatprep.mubr.bf16.mxu0 0
        %2337 = vmatmul.mubr.bf16.gmra.mrb[0].mxu0 %v2187
        %v2338 = vpop.f32.mrb[0].mxu0
        %v2339 = vadd.f32 %v2135, %v2338
        %v2340 = vpop.f32.mrb[0].mxu0
        %v2341 = vpop.f32.mrb[0].mxu0
        %v2342 = vadd.f32 %v2135, %v2341
        %v2343 = vpop.f32.mrb[0].mxu0
        %2344 = vmatprep.mubr.bf16.mxu0 0
        %2345 = vmatmul.mubr.bf16.gmra.mrb[0].mxu0 %v2190
        %v2346 = vpop.f32.mrb[0].mxu0
        %v2347 = vadd.f32 %v2135, %v2346
        %v2348 = vpop.f32.mrb[0].mxu0
        %v2349 = vpop.f32.mrb[0].mxu0
        %v2350 = vadd.f32 %v2135, %v2349
        %v2351 = vpop.f32.mrb[0].mxu0
        %2352 = vdwg.mxu0
        %v2353 = vmax.f32 %v2227, 0.0
        %v2354 = vmax.f32 %v2230, 0.0
        %v2355 = vmax.f32 %v2235, 0.0
        %v2356 = vmax.f32 %v2238, 0.0
        %v2357 = vmax.f32 %v2243, 0.0
        %v2358 = vmax.f32 %v2246, 0.0
        %v2359 = vmax.f32 %v2251, 0.0
        %v2360 = vmax.f32 %v2254, 0.0
        %v2361 = vmax.f32 %v2259, 0.0
        %v2362 = vmax.f32 %v2262, 0.0
        %v2363 = vmax.f32 %v2267, 0.0
        %v2364 = vmax.f32 %v2270, 0.0
        %v2365 = vmax.f32 %v2275, 0.0
        %v2366 = vmax.f32 %v2278, 0.0
        %v2367 = vmax.f32 %v2283, 0.0
        %v2368 = vmax.f32 %v2286, 0.0
        %v2369 = vmax.f32 %v2291, 0.0
        %v2370 = vmax.f32 %v2294, 0.0
        %v2371 = vmax.f32 %v2299, 0.0
        %v2372 = vmax.f32 %v2302, 0.0
        %v2373 = vmax.f32 %v2307, 0.0
        %v2374 = vmax.f32 %v2310, 0.0
        %v2375 = vmax.f32 %v2315, 0.0
        %v2376 = vmax.f32 %v2318, 0.0
        %v2377 = vmax.f32 %v2323, 0.0
        %v2378 = vmax.f32 %v2326, 0.0
        %v2379 = vmax.f32 %v2331, 0.0
        %v2380 = vmax.f32 %v2334, 0.0
        %v2381 = vmax.f32 %v2339, 0.0
        %v2382 = vmax.f32 %v2342, 0.0
        %v2383 = vmax.f32 %v2347, 0.0
        %v2384 = vmax.f32 %v2350, 0.0
        %v2385 = vpack.c.bf16 %v2354, %v2353
        %v2386 = vpack.c.bf16 %v2356, %v2355
        %v2387 = vpack.c.bf16 %v2358, %v2357
        %v2388 = vpack.c.bf16 %v2360, %v2359
        %v2389 = vpack.c.bf16 %v2362, %v2361
        %v2390 = vpack.c.bf16 %v2364, %v2363
        %v2391 = vpack.c.bf16 %v2366, %v2365
        %v2392 = vpack.c.bf16 %v2368, %v2367
        %v2393 = vpack.c.bf16 %v2370, %v2369
        %v2394 = vpack.c.bf16 %v2372, %v2371
        %v2395 = vpack.c.bf16 %v2374, %v2373
        %v2396 = vpack.c.bf16 %v2376, %v2375
        %v2397 = vpack.c.bf16 %v2378, %v2377
        %v2398 = vpack.c.bf16 %v2380, %v2379
        %v2399 = vpack.c.bf16 %v2382, %v2381
        %v2400 = vpack.c.bf16 %v2384, %v2383
        %v2401 = vld [vmem:[%s9] sm:$0xf]
        %v2402 = vld [vmem:[%s9 + $0x4] sm:$0xf]
        %v2403 = vld [vmem:[%s9 + $0x8] sm:$0xf]
        %v2404 = vld [vmem:[%s9 + $0xc] sm:$0xf]
        %v2405 = vld [vmem:[%s10] sm:$0x1]
        %v2407 = vlaneseq
        %v2408 = vshrl.u32 %v2407, 7
        %v2409 = vsub.s32 0, %v2408
        %v2410 = vrot.slane %v2405, %v2409
        %v2416 = vunpack.c.l.b16 %v2401
        %v2417 = vunpack.c.l.b16 %v2402
        %v2418 = vunpack.c.l.b16 %v2403
        %v2419 = vunpack.c.l.b16 %v2404
        %v2420 = vpack.c.b16 %v2417, %v2416
        %v2421 = vpack.c.b16 %v2419, %v2418
        %v2425 = vsel %vm1550, %v2385, 0
        %v2428 = vsel %vm1550, %v2386, 0
        %v2431 = vsel %vm1550, %v2387, 0
        %v2434 = vsel %vm1550, %v2388, 0
        %v2437 = vsel %vm1550, %v2389, 0
        %v2440 = vsel %vm1550, %v2390, 0
        %v2443 = vsel %vm1550, %v2391, 0
        %v2446 = vsel %vm1550, %v2392, 0
        %v2449 = vsel %vm1550, %v2393, 0
        %v2452 = vsel %vm1550, %v2394, 0
        %v2455 = vsel %vm1550, %v2395, 0
        %v2458 = vsel %vm1550, %v2396, 0
        %v2461 = vsel %vm1550, %v2397, 0
        %v2464 = vsel %vm1550, %v2398, 0
        %v2467 = vsel %vm1550, %v2399, 0
        %v2470 = vsel %vm1550, %v2400, 0
        %2472 = vmatprep.subr.bf16.mxu0 0
        %2473 = vmatpush1.bf16.msra.mxu0 %v2420
        %2474 = vmatprep.subr.bf16.mxu0 0
        %2475 = vmatpush1.bf16.msra.mxu0 %v2421
        %2476 = vmatprep.subr.bf16.mxu0 0
        %2477 = vmatpush1.bf16.msra.mxu0 0
        %2478 = vmatprep.subr.bf16.mxu0 0
        %2479 = vmatpush1.bf16.msra.mxu0 0
        %2480 = vmatprep.subr.bf16.mxu0 0
        %2481 = vmatpush1.bf16.msra.mxu0 0
        %2482 = vmatprep.subr.bf16.mxu0 0
        %2483 = vmatpush1.bf16.msra.mxu0 0
        %2484 = vmatprep.subr.bf16.mxu0 0
        %2485 = vmatpush1.bf16.msra.mxu0 0
        %2486 = vmatprep.subr.bf16.mxu0 0
        %2487 = vmatpush1.bf16.msra.mxu0 0
        %2488 = vmatprep.subr.bf16.mxu0 0
        %2489 = vmatpush1.bf16.msra.mxu0 0
        %2490 = vmatprep.subr.bf16.mxu0 0
        %2491 = vmatpush1.bf16.msra.mxu0 0
        %2492 = vmatprep.subr.bf16.mxu0 0
        %2493 = vmatpush1.bf16.msra.mxu0 0
        %2494 = vmatprep.subr.bf16.mxu0 0
        %2495 = vmatpush1.bf16.msra.mxu0 0
        %2496 = vmatprep.subr.bf16.mxu0 0
        %2497 = vmatpush1.bf16.msra.mxu0 0
        %2498 = vmatprep.subr.bf16.mxu0 0
        %2499 = vmatpush1.bf16.msra.mxu0 0
        %2500 = vmatprep.subr.bf16.mxu0 0
        %2501 = vmatpush1.bf16.msra.mxu0 0
        %2502 = vmatprep.subr.bf16.mxu0 0
        %2503 = vmatpush1.bf16.msra.mxu0 0
        %2504 = vmatprep.mubr.bf16.mxu0 0
        %2505 = vmatmul.mubr.bf16.gmra.mrb[0].mxu0 %v2425
        %v2506 = vpop.f32.mrb[0].mxu0
        %v2507 = vadd.f32 %v2410, %v2506
        %v2508 = vpop.f32.mrb[0].mxu0
        %v2509 = vpop.f32.mrb[0].mxu0
        %v2510 = vadd.f32 %v2410, %v2509
        %v2511 = vpop.f32.mrb[0].mxu0
        %2512 = vmatprep.mubr.bf16.mxu0 0
        %2513 = vmatmul.mubr.bf16.gmra.mrb[0].mxu0 %v2428
        %v2514 = vpop.f32.mrb[0].mxu0
        %v2515 = vadd.f32 %v2410, %v2514
        %v2516 = vpop.f32.mrb[0].mxu0
        %v2517 = vpop.f32.mrb[0].mxu0
        %v2518 = vadd.f32 %v2410, %v2517
        %v2519 = vpop.f32.mrb[0].mxu0
        %2520 = vmatprep.mubr.bf16.mxu0 0
        %2521 = vmatmul.mubr.bf16.gmra.mrb[0].mxu0 %v2431
        %v2522 = vpop.f32.mrb[0].mxu0
        %v2523 = vadd.f32 %v2410, %v2522
        %v2524 = vpop.f32.mrb[0].mxu0
        %v2525 = vpop.f32.mrb[0].mxu0
        %v2526 = vadd.f32 %v2410, %v2525
        %v2527 = vpop.f32.mrb[0].mxu0
        %2528 = vmatprep.mubr.bf16.mxu0 0
        %2529 = vmatmul.mubr.bf16.gmra.mrb[0].mxu0 %v2434
        %v2530 = vpop.f32.mrb[0].mxu0
        %v2531 = vadd.f32 %v2410, %v2530
        %v2532 = vpop.f32.mrb[0].mxu0
        %v2533 = vpop.f32.mrb[0].mxu0
        %v2534 = vadd.f32 %v2410, %v2533
        %v2535 = vpop.f32.mrb[0].mxu0
        %2536 = vmatprep.mubr.bf16.mxu0 0
        %2537 = vmatmul.mubr.bf16.gmra.mrb[0].mxu0 %v2437
        %v2538 = vpop.f32.mrb[0].mxu0
        %v2539 = vadd.f32 %v2410, %v2538
        %v2540 = vpop.f32.mrb[0].mxu0
        %v2541 = vpop.f32.mrb[0].mxu0
        %v2542 = vadd.f32 %v2410, %v2541
        %v2543 = vpop.f32.mrb[0].mxu0
        %2544 = vmatprep.mubr.bf16.mxu0 0
        %2545 = vmatmul.mubr.bf16.gmra.mrb[0].mxu0 %v2440
        %v2546 = vpop.f32.mrb[0].mxu0
        %v2547 = vadd.f32 %v2410, %v2546
        %v2548 = vpop.f32.mrb[0].mxu0
        %v2549 = vpop.f32.mrb[0].mxu0
        %v2550 = vadd.f32 %v2410, %v2549
        %v2551 = vpop.f32.mrb[0].mxu0
        %2552 = vmatprep.mubr.bf16.mxu0 0
        %2553 = vmatmul.mubr.bf16.gmra.mrb[0].mxu0 %v2443
        %v2554 = vpop.f32.mrb[0].mxu0
        %v2555 = vadd.f32 %v2410, %v2554
        %v2556 = vpop.f32.mrb[0].mxu0
        %v2557 = vpop.f32.mrb[0].mxu0
        %v2558 = vadd.f32 %v2410, %v2557
        %v2559 = vpop.f32.mrb[0].mxu0
        %2560 = vmatprep.mubr.bf16.mxu0 0
        %2561 = vmatmul.mubr.bf16.gmra.mrb[0].mxu0 %v2446
        %v2562 = vpop.f32.mrb[0].mxu0
        %v2563 = vadd.f32 %v2410, %v2562
        %v2564 = vpop.f32.mrb[0].mxu0
        %v2565 = vpop.f32.mrb[0].mxu0
        %v2566 = vadd.f32 %v2410, %v2565
        %v2567 = vpop.f32.mrb[0].mxu0
        %2568 = vmatprep.mubr.bf16.mxu0 0
        %2569 = vmatmul.mubr.bf16.gmra.mrb[0].mxu0 %v2449
        %v2570 = vpop.f32.mrb[0].mxu0
        %v2571 = vadd.f32 %v2410, %v2570
        %v2572 = vpop.f32.mrb[0].mxu0
        %v2573 = vpop.f32.mrb[0].mxu0
        %v2574 = vadd.f32 %v2410, %v2573
        %v2575 = vpop.f32.mrb[0].mxu0
        %2576 = vmatprep.mubr.bf16.mxu0 0
        %2577 = vmatmul.mubr.bf16.gmra.mrb[0].mxu0 %v2452
        %v2578 = vpop.f32.mrb[0].mxu0
        %v2579 = vadd.f32 %v2410, %v2578
        %v2580 = vpop.f32.mrb[0].mxu0
        %v2581 = vpop.f32.mrb[0].mxu0
        %v2582 = vadd.f32 %v2410, %v2581
        %v2583 = vpop.f32.mrb[0].mxu0
        %2584 = vmatprep.mubr.bf16.mxu0 0
        %2585 = vmatmul.mubr.bf16.gmra.mrb[0].mxu0 %v2455
        %v2586 = vpop.f32.mrb[0].mxu0
        %v2587 = vadd.f32 %v2410, %v2586
        %v2588 = vpop.f32.mrb[0].mxu0
        %v2589 = vpop.f32.mrb[0].mxu0
        %v2590 = vadd.f32 %v2410, %v2589
        %v2591 = vpop.f32.mrb[0].mxu0
        %2592 = vmatprep.mubr.bf16.mxu0 0
        %2593 = vmatmul.mubr.bf16.gmra.mrb[0].mxu0 %v2458
        %v2594 = vpop.f32.mrb[0].mxu0
        %v2595 = vadd.f32 %v2410, %v2594
        %v2596 = vpop.f32.mrb[0].mxu0
        %v2597 = vpop.f32.mrb[0].mxu0
        %v2598 = vadd.f32 %v2410, %v2597
        %v2599 = vpop.f32.mrb[0].mxu0
        %2600 = vmatprep.mubr.bf16.mxu0 0
        %2601 = vmatmul.mubr.bf16.gmra.mrb[0].mxu0 %v2461
        %v2602 = vpop.f32.mrb[0].mxu0
        %v2603 = vadd.f32 %v2410, %v2602
        %v2604 = vpop.f32.mrb[0].mxu0
        %v2605 = vpop.f32.mrb[0].mxu0
        %v2606 = vadd.f32 %v2410, %v2605
        %v2607 = vpop.f32.mrb[0].mxu0
        %2608 = vmatprep.mubr.bf16.mxu0 0
        %2609 = vmatmul.mubr.bf16.gmra.mrb[0].mxu0 %v2464
        %v2610 = vpop.f32.mrb[0].mxu0
        %v2611 = vadd.f32 %v2410, %v2610
        %v2612 = vpop.f32.mrb[0].mxu0
        %v2613 = vpop.f32.mrb[0].mxu0
        %v2614 = vadd.f32 %v2410, %v2613
        %v2615 = vpop.f32.mrb[0].mxu0
        %2616 = vmatprep.mubr.bf16.mxu0 0
        %2617 = vmatmul.mubr.bf16.gmra.mrb[0].mxu0 %v2467
        %v2618 = vpop.f32.mrb[0].mxu0
        %v2619 = vadd.f32 %v2410, %v2618
        %v2620 = vpop.f32.mrb[0].mxu0
        %v2621 = vpop.f32.mrb[0].mxu0
        %v2622 = vadd.f32 %v2410, %v2621
        %v2623 = vpop.f32.mrb[0].mxu0
        %2624 = vmatprep.mubr.bf16.mxu0 0
        %2625 = vmatmul.mubr.bf16.gmra.mrb[0].mxu0 %v2470
        %v2626 = vpop.f32.mrb[0].mxu0
        %v2627 = vadd.f32 %v2410, %v2626
        %v2628 = vpop.f32.mrb[0].mxu0
        %v2629 = vpop.f32.mrb[0].mxu0
        %v2630 = vadd.f32 %v2410, %v2629
        %v2631 = vpop.f32.mrb[0].mxu0
        %2632 = vdwg.mxu0
        %v2633 = vadd.f32 %v1634, %v2507
        %v2634 = vadd.f32 %v1637, %v2510
        %v2635 = vadd.f32 %v1642, %v2515
        %v2636 = vadd.f32 %v1645, %v2518
        %v2637 = vadd.f32 %v1650, %v2523
        %v2638 = vadd.f32 %v1653, %v2526
        %v2639 = vadd.f32 %v1658, %v2531
        %v2640 = vadd.f32 %v1661, %v2534
        %v2641 = vadd.f32 %v1666, %v2539
        %v2642 = vadd.f32 %v1669, %v2542
        %v2643 = vadd.f32 %v1674, %v2547
        %v2644 = vadd.f32 %v1677, %v2550
        %v2645 = vadd.f32 %v1682, %v2555
        %v2646 = vadd.f32 %v1685, %v2558
        %v2647 = vadd.f32 %v1690, %v2563
        %v2648 = vadd.f32 %v1693, %v2566
        %v2649 = vadd.f32 %v1698, %v2571
        %v2650 = vadd.f32 %v1701, %v2574
        %v2651 = vadd.f32 %v1706, %v2579
        %v2652 = vadd.f32 %v1709, %v2582
        %v2653 = vadd.f32 %v1714, %v2587
        %v2654 = vadd.f32 %v1717, %v2590
        %v2655 = vadd.f32 %v1722, %v2595
        %v2656 = vadd.f32 %v1725, %v2598
        %v2657 = vadd.f32 %v1730, %v2603
        %v2658 = vadd.f32 %v1733, %v2606
        %v2659 = vadd.f32 %v1738, %v2611
        %v2660 = vadd.f32 %v1741, %v2614
        %v2661 = vadd.f32 %v1746, %v2619
        %v2662 = vadd.f32 %v1749, %v2622
        %v2663 = vadd.f32 %v1754, %v2627
        %v2664 = vadd.f32 %v1757, %v2630
        %2665 = vst [vmem:[%s423] sm:$0xff] %v2633
        %2666 = vst [vmem:[%s423 + $0x8] sm:$0xff] %v2634
        %2667 = vst [vmem:[%s423 + $0x10] sm:$0xff] %v2635
        %2668 = vst [vmem:[%s423 + $0x18] sm:$0xff] %v2636
        %2669 = vst [vmem:[%s423 + $0x20] sm:$0xff] %v2637
        %2670 = vst [vmem:[%s423 + $0x28] sm:$0xff] %v2638
        %2671 = vst [vmem:[%s423 + $0x30] sm:$0xff] %v2639
        %2672 = vst [vmem:[%s423 + $0x38] sm:$0xff] %v2640
        %2673 = vst [vmem:[%s423 + $0x40] sm:$0xff] %v2641
        %2674 = vst [vmem:[%s423 + $0x48] sm:$0xff] %v2642
        %2675 = vst [vmem:[%s423 + $0x50] sm:$0xff] %v2643
        %2676 = vst [vmem:[%s423 + $0x58] sm:$0xff] %v2644
        %2677 = vst [vmem:[%s423 + $0x60] sm:$0xff] %v2645
        %2678 = vst [vmem:[%s423 + $0x68] sm:$0xff] %v2646
        %2679 = vst [vmem:[%s423 + $0x70] sm:$0xff] %v2647
        %2680 = vst [vmem:[%s423 + $0x78] sm:$0xff] %v2648
        %2681 = vst [vmem:[%s423 + $0x80] sm:$0xff] %v2649
        %2682 = vst [vmem:[%s423 + $0x88] sm:$0xff] %v2650
        %2683 = vst [vmem:[%s423 + $0x90] sm:$0xff] %v2651
        %2684 = vst [vmem:[%s423 + $0x98] sm:$0xff] %v2652
        %2685 = vst [vmem:[%s423 + $0xa0] sm:$0xff] %v2653
        %2686 = vst [vmem:[%s423 + $0xa8] sm:$0xff] %v2654
        %2687 = vst [vmem:[%s423 + $0xb0] sm:$0xff] %v2655
        %2688 = vst [vmem:[%s423 + $0xb8] sm:$0xff] %v2656
        %2689 = vst [vmem:[%s423 + $0xc0] sm:$0xff] %v2657
        %2690 = vst [vmem:[%s423 + $0xc8] sm:$0xff] %v2658
        %2691 = vst [vmem:[%s423 + $0xd0] sm:$0xff] %v2659
        %2692 = vst [vmem:[%s423 + $0xd8] sm:$0xff] %v2660
        %2693 = vst [vmem:[%s423 + $0xe0] sm:$0xff] %v2661
        %2694 = vst [vmem:[%s423 + $0xe8] sm:$0xff] %v2662
        %2695 = vst [vmem:[%s423 + $0xf0] sm:$0xff] %v2663
        %2696 = vst [vmem:[%s423 + $0xf8] sm:$0xff] %v2664
        %s2697 = sand.u32 %s296, 1
        %s2698 = scalar_lea.sflag [#allocation3], %s2697
        %s2699 = sand.u32 %s296, 1
        %s2700 = smul.addr %s2699, 256
        %s2701 = scalar_lea.vmem [#allocation2], %s2700
        // Predicated region
        $region69: #{tpu_custom_call.1} parent=67 // pred_check
          %p2702 = pneg %p306
        $region70: #{tpu_custom_call.1} parent=67 // pred_check_branch
          %2704 = sbr.rel (%p2702) target = $region72
        $region71: #{tpu_custom_call.1} parent=67 // pred_region
          %s2705 = smul.u32 32, %s26
          %s2707 = ssub.s32 4096, 4096
          %2708 = vsyncadd %s2698, %s2707
          %s2709 = smul.addr %s2705, 128
          %s2710 = scalar_lea.hbm %s12, %s2709
          %s2711 = sshll.u32 %s2701, 4
          %s2712 = int_to_ptr.vmem [resolvable:$true] %s2711
          %2717 = dma.vmem_to_hbm [thread:$0]  %s2712, 4096, %s2710, %s2698, 128, 128, 8
        $region72: #{tpu_custom_call.1} parent=67 // pred_fallthru
          _
      $region68: #{tpu_custom_call.1} parent=5 // pred_fallthru
        _
      %p2718 = scmp.le.s32.totalorder 2, %s21
      // Predicated region
      $region73: #{tpu_custom_call.1} parent=5 // pred_check
        %p2719 = pneg %p2718
      $region74: #{tpu_custom_call.1} parent=5 // pred_check_branch
        %2721 = sbr.rel (%p2719) target = $region76
      $region75: #{tpu_custom_call.1} parent=5 // pred_region
        %s2722 = ssub.s32 %s21, 2
        // Predicated region
        $region77: #{tpu_custom_call.1} parent=75 // pred_check
          %p2723 = pneg %p312
        $region78: #{tpu_custom_call.1} parent=75 // pred_check_branch
          %2725 = sbr.rel (%p2723) target = $region80
        $region79: #{tpu_custom_call.1} parent=75 // pred_region
          %s2726 = sand.u32 %s297, 1
          %s2727 = scalar_lea.sflag [#allocation3], %s2726
          %s2728 = sand.u32 %s297, 1
          %s2729 = smul.addr %s2728, 256
          %s2730 = scalar_lea.vmem [#allocation2], %s2729
          %2731 = dma.done %s2727, 4096
        $region80: #{tpu_custom_call.1} parent=75 // pred_fallthru
          _
      $region76: #{tpu_custom_call.1} parent=5 // pred_fallthru
        _
    $region6: #{tpu_custom_call.1} parent=1 // loop_footer
      %s25 = sadd.s32 1, %s21
    $region7: #{tpu_custom_call.1} parent=1 // loop_footer_branch
      %20 = sbr.rel target = $region3
    $region8: #{tpu_custom_call.1} parent=1 // loop_exit
      _
    %2732 = vsyncpa [#allocation3], 1
    %s2733 = scalar_lea.sflag [#allocation3], 1
    %2734 = vsyncpa %s2733, 1

</llo_original>
